<compile_context>
chip_gen: v6e
topology: v6e:2x2x1
jax: 0.10.0
libtpu: 0.0.40
codegen_flags: <defaults>
</compile_context>

<pallas_src>
import functools

import jax
import jax.numpy as jnp
from jax import lax
from jax.experimental import pallas as pl
from jax.experimental.pallas import tpu as pltpu

M_TOP_K = 4
ADD_MEAN = True
INNER_CHANNEL = 64
_TOTAL_DIM = 4 * (M_TOP_K + 1) if ADD_MEAN else 4 * M_TOP_K   # 20
_STAT_DIM = 4 * M_TOP_K                                        # 16 (mean folded into W1)


def _subnet_fc_kernel(x_ref, w1t_ref, b1_ref, w2t_ref, b2_ref, out_ref,
                      stat_scr, *, exact_ties):
    # x_ref:   [4, R, TM] logits (bf16/f32), side-major, anchors on lanes
    # w1t_ref: [inner, 16] mean-folded W1^T    b1_ref: [inner, 1]
    # w2t_ref: [8, inner]  (row 0 real)        b2_ref: [1, 1]
    # out_ref: [1, TM]                         stat_scr: [16, TM] f32
    r, tm = x_ref.shape[1], x_ref.shape[2]
    if exact_ties:
        # Sublane index, used to mask only the FIRST occurrence of each max.
        ridx = lax.broadcasted_iota(jnp.int32, (r, tm), 0).astype(jnp.float32)
        not_found = float(r)

    def mask_out(cur, v):
        if exact_ties:
            first = jnp.min(jnp.where(cur == v, ridx, not_found),
                            axis=0, keepdims=True)            # first tied bin
            return jnp.where(ridx == first, 0.0, cur)
        # Fast path: mask ALL entries equal to the current max.  Rows with
        # exactly duplicated maximal logits then diverge from torch.topk
        # values; use exact_ties=True if that matters for the input.
        return jnp.where(cur == v, 0.0, cur)

    for g in range(4):                                         # 4 box sides
        z = x_ref[g].astype(jnp.float32)                       # [R, TM]
        m0 = jnp.max(z, axis=0, keepdims=True)                 # [1, TM]
        e = jnp.exp(z - m0)                                    # [R, TM]; max(e)==1; z dies
        denom = jnp.sum(e, axis=0, keepdims=True)              # [1, TM]
        # NOTE(review): denom via MXU (dot with ones) deferred - the default
        # dot path would round the denominator to bf16-pass precision.
        inv = pl.reciprocal(denom)                             # exact 1/denom

        # Iterative top-k on e (softmax is monotone): one cross-sublane max
        # per step; top-1 probability is simply inv since top-1 of e is 1.0.
        probs = [inv]
        cur = mask_out(e, 1.0)
        for j in range(1, M_TOP_K):
            v = jnp.max(cur, axis=0, keepdims=True)
            probs.append(v * inv)
            if j < M_TOP_K - 1:
                cur = mask_out(cur, v)

        base = g * M_TOP_K
        for j in range(M_TOP_K):
            stat_scr[pl.ds(base + j, 1), :] = probs[j]

    # One fused K = 16 matmul + ReLU + 1-wide head, all lane-dense.
    stat = stat_scr[...]                                       # [16, TM]
    h = jnp.dot(w1t_ref[...], stat, preferred_element_type=jnp.float32)
    h = jnp.maximum(h + b1_ref[...], 0.0)                      # [inner, TM]
    out = jnp.dot(w2t_ref[...], h, preferred_element_type=jnp.float32)
    out_ref[...] = (out[0:1, :] + b2_ref[...]).astype(out_ref.dtype)


@functools.partial(jax.jit, static_argnames=("tm", "stage_dtype", "exact_ties"))
def subnet_fc_forward(x, w1, b1, w2, b2, *, tm=None,
                      stage_dtype=jnp.bfloat16, exact_ties=False):
    """x: [bs, n, 4*R]; w1: [4*(k+1), inner]; b1: [inner]; w2: [inner, 1];
    b2: [1].  Returns quality_score [bs, n, 1] (dtype of x)."""
    bs, n, c = x.shape
    r = c // 4
    inner = w1.shape[-1]
    if w1.shape[0] != _TOTAL_DIM:
        raise ValueError(f"w1 must have {_TOTAL_DIM} input features")
    m = bs * n

    # Tile selection (review items 2 & 3): as large as possible (<= 8192 rows)
    # but capped so the 1-D "parallel" grid keeps >= 2 steps for v7x's two
    # TensorCores.  tm must stay a multiple of 128 (lane width).
    m_ceil = pl.cdiv(m, 128) * 128
    if tm is None:
        tm = min(8192, m_ceil)
        if m > 128:
            tm = min(tm, pl.cdiv(pl.cdiv(m, 2), 128) * 128)
    if tm % 128 != 0:
        raise ValueError("tm must be a multiple of 128 (lane width)")
    tm = max(128, min(tm, m_ceil))
    m_pad = pl.cdiv(m, tm) * tm

    # Staging pass (review item 1): one fused XLA pad+cast+transpose puts
    # anchors on the lane axis; bf16 by default so the extra HBM round trip
    # costs half the bytes.  Zero-padded rows give a safe softmax and are
    # dropped below.
    xg = x.reshape(m, 4, r).astype(stage_dtype)
    if m_pad != m:
        xg = jnp.pad(xg, ((0, m_pad - m), (0, 0), (0, 0)))
    xg = xg.transpose(1, 2, 0)                                 # [4, R, m_pad]

    # Fold the mean statistic into W1 (exact: mean = (p0+..+p3)/k), so the
    # kernel never forms the mean rows (review item 4).
    w1f = w1.astype(jnp.float32)
    if ADD_MEAN:
        w1g = w1f.reshape(4, M_TOP_K + 1, inner)
        w1f = (w1g[:, :M_TOP_K, :] + w1g[:, M_TOP_K:, :] / M_TOP_K)
        w1f = w1f.reshape(_STAT_DIM, inner)
    w1t = w1f.T                                                # [inner, 16]
    b1c = b1.astype(jnp.float32).reshape(inner, 1)
    w2t = jnp.zeros((8, inner), jnp.float32).at[0, :].set(
        w2.astype(jnp.float32).reshape(inner))
    b2c = b2.astype(jnp.float32).reshape(1, 1)

    kernel = functools.partial(_subnet_fc_kernel, exact_ties=exact_ties)

    # TODO(synk): torch's fp16->fp32 upcast branch is approximated: compute is
    # always f32 and only the final output is cast back to x.dtype.
    out = pl.pallas_call(
        kernel,
        out_shape=jax.ShapeDtypeStruct((1, m_pad), x.dtype),
        grid=(m_pad // tm,),
        in_specs=[
            pl.BlockSpec((4, r, tm), lambda i: (0, 0, i)),
            pl.BlockSpec(w1t.shape, lambda i: (0, 0)),
            pl.BlockSpec(b1c.shape, lambda i: (0, 0)),
            pl.BlockSpec(w2t.shape, lambda i: (0, 0)),
            pl.BlockSpec(b2c.shape, lambda i: (0, 0)),
        ],
        out_specs=pl.BlockSpec((1, tm), lambda i: (0, i)),
        scratch_shapes=[pltpu.VMEM((_STAT_DIM, tm), jnp.float32)],
        compiler_params=pltpu.CompilerParams(
            dimension_semantics=("parallel",)),
    )(xg, w1t, b1c, w2t, b2c)
    return out[0, :m].reshape(bs, n, 1)


def _reference_forward(x, w1, b1, w2, b2):
    """Pure-JAX replica of the PyTorch module (f32)."""
    bs, n, c = x.shape
    xr = x.reshape(bs, n, 4, -1).astype(jnp.float32)
    p = jax.nn.softmax(xr, axis=-1)
    topk, _ = jax.lax.top_k(p, M_TOP_K)
    if ADD_MEAN:
        stat = jnp.concatenate([topk, topk.mean(axis=-1, keepdims=True)],
                               axis=-1)
    else:
        stat = topk
    s = stat.reshape(bs, n, -1)
    h = jnp.maximum(s @ w1 + b1, 0.0)
    return h @ w2 + b2


if __name__ == "__main__":
    key = jax.random.PRNGKey(0)
    kx, kw1, kb1, kw2, kb2 = jax.random.split(key, 5)

    # GFLv2-like small shapes: reg_max=16 -> 17 bins/side, n not a multiple of
    # the tile so the pad/tail path and a 2-step grid are exercised.
    bs, n, reg_bins = 2, 300, 17                               # c = 68
    x = jax.random.normal(kx, (bs, n, 4 * reg_bins), dtype=jnp.float32)
    w1 = jax.random.normal(kw1, (_TOTAL_DIM, INNER_CHANNEL), jnp.float32) * 0.01
    b1 = jax.random.normal(kb1, (INNER_CHANNEL,), jnp.float32) * 0.01
    w2 = jax.random.normal(kw2, (INNER_CHANNEL, 1), jnp.float32) * 0.01
    b2 = jax.random.normal(kb2, (1,), jnp.float32) * 0.01

    ref = _reference_forward(x, w1, b1, w2, b2)

    # 1) exact staging path (f32 in HBM).  Tolerance covers MXU dot-rounding
    #    differences between the fused folded-weight matmul and the unfused
    #    XLA reference; the unfolded math is algebraically identical.
    out32 = jax.block_until_ready(
        subnet_fc_forward(x, w1, b1, w2, b2, stage_dtype=jnp.float32))
    assert out32.shape == (bs, n, 1)
    assert jnp.allclose(out32, ref, atol=2e-4, rtol=2e-3), float(
        jnp.max(jnp.abs(out32 - ref)))

    # 2) default fast path (bf16 HBM staging; in-kernel math still f32).
    out16 = jax.block_until_ready(subnet_fc_forward(x, w1, b1, w2, b2))
    assert out16.shape == (bs, n, 1)
    assert jnp.allclose(out16, ref, atol=5e-4, rtol=5e-3), float(
        jnp.max(jnp.abs(out16 - ref)))

    # 3) exact tie handling: rows with all-equal bins and rows with duplicated
    #    maximal logits must reproduce torch.topk's duplicate values.
    x_tie = x.at[0, :5, :].set(0.3)
    row = x_tie[1, 7].reshape(4, reg_bins)
    row = row.at[:, 2].set(2.5).at[:, 5].set(2.5)
    x_tie = x_tie.at[1, 7].set(row.reshape(-1))
    ref_tie = _reference_forward(x_tie, w1, b1, w2, b2)
    out_tie = jax.block_until_ready(
        subnet_fc_forward(x_tie, w1, b1, w2, b2,
                          stage_dtype=jnp.float32, exact_ties=True))
    assert jnp.allclose(out_tie, ref_tie, atol=2e-4, rtol=2e-3), float(
        jnp.max(jnp.abs(out_tie - ref_tie)))

    print("KERNEL_OK")
</pallas_src>

<mosaic_0001>
module attributes {stable_mosaic.version = 11 : i64} {
  func.func @_subnet_fc_kernel(%arg0: i32, %arg1: memref<4x17x384xf32, #tpu.memory_space<vmem>>, %arg2: memref<64x16xf32, #tpu.memory_space<vmem>>, %arg3: memref<64x1xf32, #tpu.memory_space<vmem>>, %arg4: memref<8x64xf32, #tpu.memory_space<vmem>>, %arg5: memref<1x1xf32, #tpu.memory_space<vmem>>, %arg6: memref<1x384xf32, #tpu.memory_space<vmem>>, %arg7: memref<16x384xf32, #tpu.memory_space<vmem>>) attributes {dimension_semantics = [#tpu.dimension_semantics<parallel>], iteration_bounds = array<i64: 2>, scalar_prefetch = 0 : i64, scratch_operands = 1 : i64, tpu.core_type = #tpu.core_type<tc>, window_params = [{transform_indices = @transform_0, window_bounds = array<i64: 4, 17, 384>}, {pipeline_mode = #tpu.pipeline_mode<synchronous>, transform_indices = @transform_1, window_bounds = array<i64: 64, 16>}, {pipeline_mode = #tpu.pipeline_mode<synchronous>, transform_indices = @transform_2, window_bounds = array<i64: 64, 1>}, {pipeline_mode = #tpu.pipeline_mode<synchronous>, transform_indices = @transform_3, window_bounds = array<i64: 8, 64>}, {pipeline_mode = #tpu.pipeline_mode<synchronous>, transform_indices = @transform_4, window_bounds = array<i64: 1, 1>}, {transform_indices = @transform_5, window_bounds = array<i64: 1, 384>}]} {
    %c0 = arith.constant 0 : index
    %c0_0 = arith.constant 0 : index
    %c0_1 = arith.constant 0 : index
    %0 = vector.load %arg1[%c0, %c0_0, %c0_1] : memref<4x17x384xf32, #tpu.memory_space<vmem>>, vector<1x17x384xf32>
    %1 = vector.shape_cast %0 : vector<1x17x384xf32> to vector<17x384xf32>
    %cst = arith.constant dense<0xFF800000> : vector<384xf32>
    %2 = vector.multi_reduction <maximumf>, %1, %cst [0] : vector<17x384xf32> to vector<384xf32>
    %3 = vector.shape_cast %2 : vector<384xf32> to vector<1x384xf32>
    %4 = vector.broadcast %3 : vector<1x384xf32> to vector<17x384xf32>
    %5 = arith.subf %1, %4 : vector<17x384xf32>
    %6 = math.exp %5 : vector<17x384xf32>
    %cst_2 = arith.constant dense<0.000000e+00> : vector<384xf32>
    %7 = vector.multi_reduction <add>, %6, %cst_2 [0] : vector<17x384xf32> to vector<384xf32>
    %8 = vector.shape_cast %7 : vector<384xf32> to vector<1x384xf32>
    %9 = tpu.reciprocal %8 : vector<1x384xf32> -> vector<1x384xf32>
    %cst_3 = arith.constant 1.000000e+00 : f32
    %10 = vector.broadcast %cst_3 : f32 to vector<17x384xf32>
    %11 = arith.cmpf oeq, %6, %10 : vector<17x384xf32>
    %cst_4 = arith.constant 0.000000e+00 : f32
    %12 = vector.broadcast %cst_4 : f32 to vector<17x384xf32>
    %13 = arith.select %11, %12, %6 : vector<17x384xi1>, vector<17x384xf32>
    %cst_5 = arith.constant dense<0xFF800000> : vector<384xf32>
    %14 = vector.multi_reduction <maximumf>, %13, %cst_5 [0] : vector<17x384xf32> to vector<384xf32>
    %15 = vector.shape_cast %14 : vector<384xf32> to vector<1x384xf32>
    %16 = arith.mulf %15, %9 : vector<1x384xf32>
    %17 = vector.broadcast %15 : vector<1x384xf32> to vector<17x384xf32>
    %18 = arith.cmpf oeq, %13, %17 : vector<17x384xf32>
    %cst_6 = arith.constant 0.000000e+00 : f32
    %19 = vector.broadcast %cst_6 : f32 to vector<17x384xf32>
    %20 = arith.select %18, %19, %13 : vector<17x384xi1>, vector<17x384xf32>
    %cst_7 = arith.constant dense<0xFF800000> : vector<384xf32>
    %21 = vector.multi_reduction <maximumf>, %20, %cst_7 [0] : vector<17x384xf32> to vector<384xf32>
    %22 = vector.shape_cast %21 : vector<384xf32> to vector<1x384xf32>
    %23 = arith.mulf %22, %9 : vector<1x384xf32>
    %24 = vector.broadcast %22 : vector<1x384xf32> to vector<17x384xf32>
    %25 = arith.cmpf oeq, %20, %24 : vector<17x384xf32>
    %cst_8 = arith.constant 0.000000e+00 : f32
    %26 = vector.broadcast %cst_8 : f32 to vector<17x384xf32>
    %27 = arith.select %25, %26, %20 : vector<17x384xi1>, vector<17x384xf32>
    %cst_9 = arith.constant dense<0xFF800000> : vector<384xf32>
    %28 = vector.multi_reduction <maximumf>, %27, %cst_9 [0] : vector<17x384xf32> to vector<384xf32>
    %29 = vector.shape_cast %28 : vector<384xf32> to vector<1x384xf32>
    %30 = arith.mulf %29, %9 : vector<1x384xf32>
    %c0_10 = arith.constant 0 : index
    %c0_11 = arith.constant 0 : index
    %31 = vector.load %arg7[%c0_10, %c0_11] : memref<16x384xf32, #tpu.memory_space<vmem>>, vector<1x384xf32>
    tpu.vector_store %arg7[%c0_10, %c0_11], %9 {strides = array<i32>} : memref<16x384xf32, #tpu.memory_space<vmem>>, vector<1x384xf32>,
    %c1 = arith.constant 1 : index
    %c0_12 = arith.constant 0 : index
    %32 = vector.load %arg7[%c1, %c0_12] : memref<16x384xf32, #tpu.memory_space<vmem>>, vector<1x384xf32>
    tpu.vector_store %arg7[%c1, %c0_12], %16 {strides = array<i32>} : memref<16x384xf32, #tpu.memory_space<vmem>>, vector<1x384xf32>,
    %c2 = arith.constant 2 : index
    %c0_13 = arith.constant 0 : index
    %33 = vector.load %arg7[%c2, %c0_13] : memref<16x384xf32, #tpu.memory_space<vmem>>, vector<1x384xf32>
    tpu.vector_store %arg7[%c2, %c0_13], %23 {strides = array<i32>} : memref<16x384xf32, #tpu.memory_space<vmem>>, vector<1x384xf32>,
    %c3 = arith.constant 3 : index
    %c0_14 = arith.constant 0 : index
    %34 = vector.load %arg7[%c3, %c0_14] : memref<16x384xf32, #tpu.memory_space<vmem>>, vector<1x384xf32>
    tpu.vector_store %arg7[%c3, %c0_14], %30 {strides = array<i32>} : memref<16x384xf32, #tpu.memory_space<vmem>>, vector<1x384xf32>,
    %c1_15 = arith.constant 1 : index
    %c0_16 = arith.constant 0 : index
    %c0_17 = arith.constant 0 : index
    %35 = vector.load %arg1[%c1_15, %c0_16, %c0_17] : memref<4x17x384xf32, #tpu.memory_space<vmem>>, vector<1x17x384xf32>
    %36 = vector.shape_cast %35 : vector<1x17x384xf32> to vector<17x384xf32>
    %cst_18 = arith.constant dense<0xFF800000> : vector<384xf32>
    %37 = vector.multi_reduction <maximumf>, %36, %cst_18 [0] : vector<17x384xf32> to vector<384xf32>
    %38 = vector.shape_cast %37 : vector<384xf32> to vector<1x384xf32>
    %39 = vector.broadcast %38 : vector<1x384xf32> to vector<17x384xf32>
    %40 = arith.subf %36, %39 : vector<17x384xf32>
    %41 = math.exp %40 : vector<17x384xf32>
    %cst_19 = arith.constant dense<0.000000e+00> : vector<384xf32>
    %42 = vector.multi_reduction <add>, %41, %cst_19 [0] : vector<17x384xf32> to vector<384xf32>
    %43 = vector.shape_cast %42 : vector<384xf32> to vector<1x384xf32>
    %44 = tpu.reciprocal %43 : vector<1x384xf32> -> vector<1x384xf32>
    %cst_20 = arith.constant 1.000000e+00 : f32
    %45 = vector.broadcast %cst_20 : f32 to vector<17x384xf32>
    %46 = arith.cmpf oeq, %41, %45 : vector<17x384xf32>
    %cst_21 = arith.constant 0.000000e+00 : f32
    %47 = vector.broadcast %cst_21 : f32 to vector<17x384xf32>
    %48 = arith.select %46, %47, %41 : vector<17x384xi1>, vector<17x384xf32>
    %cst_22 = arith.constant dense<0xFF800000> : vector<384xf32>
    %49 = vector.multi_reduction <maximumf>, %48, %cst_22 [0] : vector<17x384xf32> to vector<384xf32>
    %50 = vector.shape_cast %49 : vector<384xf32> to vector<1x384xf32>
    %51 = arith.mulf %50, %44 : vector<1x384xf32>
    %52 = vector.broadcast %50 : vector<1x384xf32> to vector<17x384xf32>
    %53 = arith.cmpf oeq, %48, %52 : vector<17x384xf32>
    %cst_23 = arith.constant 0.000000e+00 : f32
    %54 = vector.broadcast %cst_23 : f32 to vector<17x384xf32>
    %55 = arith.select %53, %54, %48 : vector<17x384xi1>, vector<17x384xf32>
    %cst_24 = arith.constant dense<0xFF800000> : vector<384xf32>
    %56 = vector.multi_reduction <maximumf>, %55, %cst_24 [0] : vector<17x384xf32> to vector<384xf32>
    %57 = vector.shape_cast %56 : vector<384xf32> to vector<1x384xf32>
    %58 = arith.mulf %57, %44 : vector<1x384xf32>
    %59 = vector.broadcast %57 : vector<1x384xf32> to vector<17x384xf32>
    %60 = arith.cmpf oeq, %55, %59 : vector<17x384xf32>
    %cst_25 = arith.constant 0.000000e+00 : f32
    %61 = vector.broadcast %cst_25 : f32 to vector<17x384xf32>
    %62 = arith.select %60, %61, %55 : vector<17x384xi1>, vector<17x384xf32>
    %cst_26 = arith.constant dense<0xFF800000> : vector<384xf32>
    %63 = vector.multi_reduction <maximumf>, %62, %cst_26 [0] : vector<17x384xf32> to vector<384xf32>
    %64 = vector.shape_cast %63 : vector<384xf32> to vector<1x384xf32>
    %65 = arith.mulf %64, %44 : vector<1x384xf32>
    %c4 = arith.constant 4 : index
    %c0_27 = arith.constant 0 : index
    %66 = vector.load %arg7[%c4, %c0_27] : memref<16x384xf32, #tpu.memory_space<vmem>>, vector<1x384xf32>
    tpu.vector_store %arg7[%c4, %c0_27], %44 {strides = array<i32>} : memref<16x384xf32, #tpu.memory_space<vmem>>, vector<1x384xf32>,
    %c5 = arith.constant 5 : index
    %c0_28 = arith.constant 0 : index
    %67 = vector.load %arg7[%c5, %c0_28] : memref<16x384xf32, #tpu.memory_space<vmem>>, vector<1x384xf32>
    tpu.vector_store %arg7[%c5, %c0_28], %51 {strides = array<i32>} : memref<16x384xf32, #tpu.memory_space<vmem>>, vector<1x384xf32>,
    %c6 = arith.constant 6 : index
    %c0_29 = arith.constant 0 : index
    %68 = vector.load %arg7[%c6, %c0_29] : memref<16x384xf32, #tpu.memory_space<vmem>>, vector<1x384xf32>
    tpu.vector_store %arg7[%c6, %c0_29], %58 {strides = array<i32>} : memref<16x384xf32, #tpu.memory_space<vmem>>, vector<1x384xf32>,
    %c7 = arith.constant 7 : index
    %c0_30 = arith.constant 0 : index
    %69 = vector.load %arg7[%c7, %c0_30] : memref<16x384xf32, #tpu.memory_space<vmem>>, vector<1x384xf32>
    tpu.vector_store %arg7[%c7, %c0_30], %65 {strides = array<i32>} : memref<16x384xf32, #tpu.memory_space<vmem>>, vector<1x384xf32>,
    %c2_31 = arith.constant 2 : index
    %c0_32 = arith.constant 0 : index
    %c0_33 = arith.constant 0 : index
    %70 = vector.load %arg1[%c2_31, %c0_32, %c0_33] : memref<4x17x384xf32, #tpu.memory_space<vmem>>, vector<1x17x384xf32>
    %71 = vector.shape_cast %70 : vector<1x17x384xf32> to vector<17x384xf32>
    %cst_34 = arith.constant dense<0xFF800000> : vector<384xf32>
    %72 = vector.multi_reduction <maximumf>, %71, %cst_34 [0] : vector<17x384xf32> to vector<384xf32>
    %73 = vector.shape_cast %72 : vector<384xf32> to vector<1x384xf32>
    %74 = vector.broadcast %73 : vector<1x384xf32> to vector<17x384xf32>
    %75 = arith.subf %71, %74 : vector<17x384xf32>
    %76 = math.exp %75 : vector<17x384xf32>
    %cst_35 = arith.constant dense<0.000000e+00> : vector<384xf32>
    %77 = vector.multi_reduction <add>, %76, %cst_35 [0] : vector<17x384xf32> to vector<384xf32>
    %78 = vector.shape_cast %77 : vector<384xf32> to vector<1x384xf32>
    %79 = tpu.reciprocal %78 : vector<1x384xf32> -> vector<1x384xf32>
    %cst_36 = arith.constant 1.000000e+00 : f32
    %80 = vector.broadcast %cst_36 : f32 to vector<17x384xf32>
    %81 = arith.cmpf oeq, %76, %80 : vector<17x384xf32>
    %cst_37 = arith.constant 0.000000e+00 : f32
    %82 = vector.broadcast %cst_37 : f32 to vector<17x384xf32>
    %83 = arith.select %81, %82, %76 : vector<17x384xi1>, vector<17x384xf32>
    %cst_38 = arith.constant dense<0xFF800000> : vector<384xf32>
    %84 = vector.multi_reduction <maximumf>, %83, %cst_38 [0] : vector<17x384xf32> to vector<384xf32>
    %85 = vector.shape_cast %84 : vector<384xf32> to vector<1x384xf32>
    %86 = arith.mulf %85, %79 : vector<1x384xf32>
    %87 = vector.broadcast %85 : vector<1x384xf32> to vector<17x384xf32>
    %88 = arith.cmpf oeq, %83, %87 : vector<17x384xf32>
    %cst_39 = arith.constant 0.000000e+00 : f32
    %89 = vector.broadcast %cst_39 : f32 to vector<17x384xf32>
    %90 = arith.select %88, %89, %83 : vector<17x384xi1>, vector<17x384xf32>
    %cst_40 = arith.constant dense<0xFF800000> : vector<384xf32>
    %91 = vector.multi_reduction <maximumf>, %90, %cst_40 [0] : vector<17x384xf32> to vector<384xf32>
    %92 = vector.shape_cast %91 : vector<384xf32> to vector<1x384xf32>
    %93 = arith.mulf %92, %79 : vector<1x384xf32>
    %94 = vector.broadcast %92 : vector<1x384xf32> to vector<17x384xf32>
    %95 = arith.cmpf oeq, %90, %94 : vector<17x384xf32>
    %cst_41 = arith.constant 0.000000e+00 : f32
    %96 = vector.broadcast %cst_41 : f32 to vector<17x384xf32>
    %97 = arith.select %95, %96, %90 : vector<17x384xi1>, vector<17x384xf32>
    %cst_42 = arith.constant dense<0xFF800000> : vector<384xf32>
    %98 = vector.multi_reduction <maximumf>, %97, %cst_42 [0] : vector<17x384xf32> to vector<384xf32>
    %99 = vector.shape_cast %98 : vector<384xf32> to vector<1x384xf32>
    %100 = arith.mulf %99, %79 : vector<1x384xf32>
    %c8 = arith.constant 8 : index
    %c0_43 = arith.constant 0 : index
    %101 = vector.load %arg7[%c8, %c0_43] : memref<16x384xf32, #tpu.memory_space<vmem>>, vector<1x384xf32>
    tpu.vector_store %arg7[%c8, %c0_43], %79 {strides = array<i32>} : memref<16x384xf32, #tpu.memory_space<vmem>>, vector<1x384xf32>,
    %c9 = arith.constant 9 : index
    %c0_44 = arith.constant 0 : index
    %102 = vector.load %arg7[%c9, %c0_44] : memref<16x384xf32, #tpu.memory_space<vmem>>, vector<1x384xf32>
    tpu.vector_store %arg7[%c9, %c0_44], %86 {strides = array<i32>} : memref<16x384xf32, #tpu.memory_space<vmem>>, vector<1x384xf32>,
    %c10 = arith.constant 10 : index
    %c0_45 = arith.constant 0 : index
    %103 = vector.load %arg7[%c10, %c0_45] : memref<16x384xf32, #tpu.memory_space<vmem>>, vector<1x384xf32>
    tpu.vector_store %arg7[%c10, %c0_45], %93 {strides = array<i32>} : memref<16x384xf32, #tpu.memory_space<vmem>>, vector<1x384xf32>,
    %c11 = arith.constant 11 : index
    %c0_46 = arith.constant 0 : index
    %104 = vector.load %arg7[%c11, %c0_46] : memref<16x384xf32, #tpu.memory_space<vmem>>, vector<1x384xf32>
    tpu.vector_store %arg7[%c11, %c0_46], %100 {strides = array<i32>} : memref<16x384xf32, #tpu.memory_space<vmem>>, vector<1x384xf32>,
    %c3_47 = arith.constant 3 : index
    %c0_48 = arith.constant 0 : index
    %c0_49 = arith.constant 0 : index
    %105 = vector.load %arg1[%c3_47, %c0_48, %c0_49] : memref<4x17x384xf32, #tpu.memory_space<vmem>>, vector<1x17x384xf32>
    %106 = vector.shape_cast %105 : vector<1x17x384xf32> to vector<17x384xf32>
    %cst_50 = arith.constant dense<0xFF800000> : vector<384xf32>
    %107 = vector.multi_reduction <maximumf>, %106, %cst_50 [0] : vector<17x384xf32> to vector<384xf32>
    %108 = vector.shape_cast %107 : vector<384xf32> to vector<1x384xf32>
    %109 = vector.broadcast %108 : vector<1x384xf32> to vector<17x384xf32>
    %110 = arith.subf %106, %109 : vector<17x384xf32>
    %111 = math.exp %110 : vector<17x384xf32>
    %cst_51 = arith.constant dense<0.000000e+00> : vector<384xf32>
    %112 = vector.multi_reduction <add>, %111, %cst_51 [0] : vector<17x384xf32> to vector<384xf32>
    %113 = vector.shape_cast %112 : vector<384xf32> to vector<1x384xf32>
    %114 = tpu.reciprocal %113 : vector<1x384xf32> -> vector<1x384xf32>
    %cst_52 = arith.constant 1.000000e+00 : f32
    %115 = vector.broadcast %cst_52 : f32 to vector<17x384xf32>
    %116 = arith.cmpf oeq, %111, %115 : vector<17x384xf32>
    %cst_53 = arith.constant 0.000000e+00 : f32
    %117 = vector.broadcast %cst_53 : f32 to vector<17x384xf32>
    %118 = arith.select %116, %117, %111 : vector<17x384xi1>, vector<17x384xf32>
    %cst_54 = arith.constant dense<0xFF800000> : vector<384xf32>
    %119 = vector.multi_reduction <maximumf>, %118, %cst_54 [0] : vector<17x384xf32> to vector<384xf32>
    %120 = vector.shape_cast %119 : vector<384xf32> to vector<1x384xf32>
    %121 = arith.mulf %120, %114 : vector<1x384xf32>
    %122 = vector.broadcast %120 : vector<1x384xf32> to vector<17x384xf32>
    %123 = arith.cmpf oeq, %118, %122 : vector<17x384xf32>
    %cst_55 = arith.constant 0.000000e+00 : f32
    %124 = vector.broadcast %cst_55 : f32 to vector<17x384xf32>
    %125 = arith.select %123, %124, %118 : vector<17x384xi1>, vector<17x384xf32>
    %cst_56 = arith.constant dense<0xFF800000> : vector<384xf32>
    %126 = vector.multi_reduction <maximumf>, %125, %cst_56 [0] : vector<17x384xf32> to vector<384xf32>
    %127 = vector.shape_cast %126 : vector<384xf32> to vector<1x384xf32>
    %128 = arith.mulf %127, %114 : vector<1x384xf32>
    %129 = vector.broadcast %127 : vector<1x384xf32> to vector<17x384xf32>
    %130 = arith.cmpf oeq, %125, %129 : vector<17x384xf32>
    %cst_57 = arith.constant 0.000000e+00 : f32
    %131 = vector.broadcast %cst_57 : f32 to vector<17x384xf32>
    %132 = arith.select %130, %131, %125 : vector<17x384xi1>, vector<17x384xf32>
    %cst_58 = arith.constant dense<0xFF800000> : vector<384xf32>
    %133 = vector.multi_reduction <maximumf>, %132, %cst_58 [0] : vector<17x384xf32> to vector<384xf32>
    %134 = vector.shape_cast %133 : vector<384xf32> to vector<1x384xf32>
    %135 = arith.mulf %134, %114 : vector<1x384xf32>
    %c12 = arith.constant 12 : index
    %c0_59 = arith.constant 0 : index
    %136 = vector.load %arg7[%c12, %c0_59] : memref<16x384xf32, #tpu.memory_space<vmem>>, vector<1x384xf32>
    tpu.vector_store %arg7[%c12, %c0_59], %114 {strides = array<i32>} : memref<16x384xf32, #tpu.memory_space<vmem>>, vector<1x384xf32>,
    %c13 = arith.constant 13 : index
    %c0_60 = arith.constant 0 : index
    %137 = vector.load %arg7[%c13, %c0_60] : memref<16x384xf32, #tpu.memory_space<vmem>>, vector<1x384xf32>
    tpu.vector_store %arg7[%c13, %c0_60], %121 {strides = array<i32>} : memref<16x384xf32, #tpu.memory_space<vmem>>, vector<1x384xf32>,
    %c14 = arith.constant 14 : index
    %c0_61 = arith.constant 0 : index
    %138 = vector.load %arg7[%c14, %c0_61] : memref<16x384xf32, #tpu.memory_space<vmem>>, vector<1x384xf32>
    tpu.vector_store %arg7[%c14, %c0_61], %128 {strides = array<i32>} : memref<16x384xf32, #tpu.memory_space<vmem>>, vector<1x384xf32>,
    %c15 = arith.constant 15 : index
    %c0_62 = arith.constant 0 : index
    %139 = vector.load %arg7[%c15, %c0_62] : memref<16x384xf32, #tpu.memory_space<vmem>>, vector<1x384xf32>
    tpu.vector_store %arg7[%c15, %c0_62], %135 {strides = array<i32>} : memref<16x384xf32, #tpu.memory_space<vmem>>, vector<1x384xf32>,
    %c0_63 = arith.constant 0 : index
    %c0_64 = arith.constant 0 : index
    %140 = vector.load %arg7[%c0_63, %c0_64] : memref<16x384xf32, #tpu.memory_space<vmem>>, vector<16x384xf32>
    %c0_65 = arith.constant 0 : index
    %c0_66 = arith.constant 0 : index
    %141 = vector.load %arg2[%c0_65, %c0_66] : memref<64x16xf32, #tpu.memory_space<vmem>>, vector<64x16xf32>
    %cst_67 = arith.constant dense<0.000000e+00> : vector<64x384xf32>
    %142 = tpu.matmul %141, %140, %cst_67 {dimension_numbers = #tpu.dot_dimension_numbers<[1], [0], [0], [1], [0, 0, 1, 1], [], []>} : vector<64x16xf32>, vector<16x384xf32>, vector<64x384xf32> -> vector<64x384xf32>
    %c0_68 = arith.constant 0 : index
    %c0_69 = arith.constant 0 : index
    %143 = vector.load %arg3[%c0_68, %c0_69] : memref<64x1xf32, #tpu.memory_space<vmem>>, vector<64x1xf32>
    %144 = vector.broadcast %143 : vector<64x1xf32> to vector<64x384xf32>
    %145 = arith.addf %142, %144 : vector<64x384xf32>
    %cst_70 = arith.constant 0.000000e+00 : f32
    %146 = vector.broadcast %cst_70 : f32 to vector<64x384xf32>
    %147 = arith.maximumf %145, %146 : vector<64x384xf32>
    %c0_71 = arith.constant 0 : index
    %c0_72 = arith.constant 0 : index
    %148 = vector.load %arg4[%c0_71, %c0_72] : memref<8x64xf32, #tpu.memory_space<vmem>>, vector<8x64xf32>
    %cst_73 = arith.constant dense<0.000000e+00> : vector<8x384xf32>
    %149 = tpu.matmul %148, %147, %cst_73 {dimension_numbers = #tpu.dot_dimension_numbers<[1], [0], [0], [1], [0, 0, 1, 1], [], []>} : vector<8x64xf32>, vector<64x384xf32>, vector<8x384xf32> -> vector<8x384xf32>
    %150 = vector.extract_strided_slice %149 {offsets = [0, 0], sizes = [1, 384], strides = [1, 1]} : vector<8x384xf32> to vector<1x384xf32>
    %c0_74 = arith.constant 0 : index
    %c0_75 = arith.constant 0 : index
    %151 = vector.load %arg5[%c0_74, %c0_75] : memref<1x1xf32, #tpu.memory_space<vmem>>, vector<1x1xf32>
    %152 = vector.broadcast %151 : vector<1x1xf32> to vector<1x384xf32>
    %153 = arith.addf %150, %152 : vector<1x384xf32>
    %c0_76 = arith.constant 0 : index
    %c0_77 = arith.constant 0 : index
    %154 = vector.load %arg6[%c0_76, %c0_77] : memref<1x384xf32, #tpu.memory_space<vmem>>, vector<1x384xf32>
    tpu.vector_store %arg6[%c0_76, %c0_77], %153 {strides = array<i32>} : memref<1x384xf32, #tpu.memory_space<vmem>>, vector<1x384xf32>,
    return
  }
  func.func @transform_0(%arg0: i32) -> (i32, i32, i32) {
    %c0_i32 = arith.constant 0 : i32
    %c0_i32_0 = arith.constant 0 : i32
    %c0_i32_1 = arith.constant 0 : i32
    return %c0_i32, %c0_i32_0, %arg0 : i32, i32, i32
  }
  func.func @transform_1(%arg0: i32) -> (i32, i32) {
    %c0_i32 = arith.constant 0 : i32
    %c0_i32_0 = arith.constant 0 : i32
    %c0_i32_1 = arith.constant 0 : i32
    return %c0_i32, %c0_i32_0 : i32, i32
  }
  func.func @transform_2(%arg0: i32) -> (i32, i32) {
    %c0_i32 = arith.constant 0 : i32
    %c0_i32_0 = arith.constant 0 : i32
    %c0_i32_1 = arith.constant 0 : i32
    return %c0_i32, %c0_i32_0 : i32, i32
  }
  func.func @transform_3(%arg0: i32) -> (i32, i32) {
    %c0_i32 = arith.constant 0 : i32
    %c0_i32_0 = arith.constant 0 : i32
    %c0_i32_1 = arith.constant 0 : i32
    return %c0_i32, %c0_i32_0 : i32, i32
  }
  func.func @transform_4(%arg0: i32) -> (i32, i32) {
    %c0_i32 = arith.constant 0 : i32
    %c0_i32_0 = arith.constant 0 : i32
    %c0_i32_1 = arith.constant 0 : i32
    return %c0_i32, %c0_i32_0 : i32, i32
  }
  func.func @transform_5(%arg0: i32) -> (i32, i32) {
    %c0_i32 = arith.constant 0 : i32
    %c0_i32_0 = arith.constant 0 : i32
    return %c0_i32, %arg0 : i32, i32
  }
}

</mosaic_0001>

<llo_original>
// kernel: squeeze.0
$region0: #{squeeze.0}
  %s0 = inlined_call_operand.vmem [shape: f32[600], index: 0, kind: input, shape index: {}]
  %s1 = inlined_call_operand.hbm [shape: f32[2,300,1], index: 1, kind: output, shape index: {}]
  $region1: #{squeeze.0} parent=0
    #allocation0 [shape = 'u8[3072]{0}', space=vmem, size = 0xc00, scoped, tag = 'operand span for operand 1']
    #allocation1 [shape = 's32[1]{0}', space=sflag, size = 0x4, scoped, tag = 'scoped memory for squeeze.0']
    #allocation2 [shape = 'u8[24576]{0}', space=vmem, size = 0x6000, scoped, tag = 'scoped mem for output reshape']
    %2 = vsyncpa [#allocation1], 0
    %s3 = scalar_lea.vmem %s0, 2
    %v4 = vld [vmem:[%s3] sm:$0x1]
    %vm5 = vcmask 359424
    %s6 = scalar_lea.vmem [#allocation2], 16
    %7 = vst.msk [vmem:[%s6] sm:$0x1] %vm5, %v4
    %v8 = vld [vmem:[%s0] sm:$0x3]
    %9 = vst [vmem:[#allocation2] ss:$8 sm:$0x3] %v8
    %s10 = scalar_lea.vmem %s0, 4
    %v11 = vld [vmem:[%s10] sm:$0x1]
    %s12 = scalar_lea.vmem %s0, 4
    %s13 = smov 3
    %v14 = vld [vmem:[%s12] ss:$-1 sm:%s13]
    %vm15 = vcmask 359424
    %v16 = vsel %vm15, %v14, %v11
    %17 = vrot.lane.b32.xlu0 %v16, 84
    %v18 = vpop.permute.xlu0 %17
    %vm19 = vcmask 359424
    %s20 = scalar_lea.vmem [#allocation2], 40
    %21 = vst.msk [vmem:[%s20] sm:$0x1] %vm19, %v18
    %vm22 = vcmask 1048224
    %s23 = scalar_lea.vmem [#allocation2], 32
    %24 = vst.msk [vmem:[%s23] ss:$-8 sm:$0x3] %vm22, %v18
    %s25 = scalar_lea.vmem %s0, 3
    %s26 = smov 3
    %v27 = vld [vmem:[%s25] ss:$-1 sm:%s26]
    %28 = vrot.lane.b32.xlu0 %v27, 84
    %v29 = vpop.permute.xlu0 %28
    %vm30 = vcmask 687104
    %s31 = scalar_lea.vmem [#allocation2], 32
    %32 = vst.msk [vmem:[%s31] ss:$-8 sm:$0x3] %vm30, %v29
    %s34 = sshll.u32 1, 1
    %s35 = ssub.s32 %s34, 1
    %v37 = vld [vmem:[#allocation2] sm:%s35]
    %s38 = sshll.u32 1, 1
    %s39 = ssub.s32 %s38, 1
    %40 = vst [vmem:[#allocation0] sm:%s39] %v37
    %s41 = scalar_lea.vmem [#allocation2], 8
    %v42 = vld [vmem:[%s41] sm:%s35]
    %s43 = sshll.u32 1, 1
    %s44 = ssub.s32 %s43, 1
    %s45 = scalar_lea.vmem [#allocation0], 1
    %46 = vst [vmem:[%s45] sm:%s44] %v42
    %s47 = scalar_lea.vmem [#allocation2], 16
    %v48 = vld [vmem:[%s47] sm:%s35]
    %s49 = sshll.u32 1, 1
    %s50 = ssub.s32 %s49, 1
    %s51 = smul.addr 1, 2
    %s52 = scalar_lea.vmem [#allocation0], %s51
    %53 = vst [vmem:[%s52] sm:%s50] %v48
    %s54 = scalar_lea.vmem [#allocation2], 24
    %v55 = vld [vmem:[%s54] sm:%s35]
    %s56 = sshll.u32 1, 1
    %s57 = ssub.s32 %s56, 1
    %s58 = smul.addr 1, 3
    %s59 = scalar_lea.vmem [#allocation0], %s58
    %60 = vst [vmem:[%s59] sm:%s57] %v55
    %s61 = scalar_lea.vmem [#allocation2], 32
    %v62 = vld [vmem:[%s61] sm:%s35]
    %s63 = sshll.u32 1, 1
    %s64 = ssub.s32 %s63, 1
    %s65 = smul.addr 1, 4
    %s66 = scalar_lea.vmem [#allocation0], %s65
    %67 = vst [vmem:[%s66] sm:%s64] %v62
    %s68 = scalar_lea.vmem [#allocation2], 40
    %v69 = vld [vmem:[%s68] sm:%s35]
    %s70 = sshll.u32 1, 1
    %s71 = ssub.s32 %s70, 1
    %s72 = smul.addr 1, 5
    %s73 = scalar_lea.vmem [#allocation0], %s72
    %74 = vst [vmem:[%s73] sm:%s71] %v69
    %s76 = ssub.s32 96, 96
    %77 = vsyncadd [#allocation1], %s76
    %s79 = sshll.u32 [#allocation0], 4
    %s80 = int_to_ptr.vmem [resolvable:$true] %s79
    %82 = dma.vmem_to_hbm [thread:$0]  %s80, 96, %s1, [#allocation1]
    %83 = dma.done [#allocation1], 96
    %84 = vsyncpa [#allocation1], 1

// kernel: subnet_fc_forward.1
$region0: #{subnet_fc_forward.1}
  #allocation0 [shape = 'u32[]', space=smem, size = 0x4, offset = 0x4, fixed_abs, tag = 'smem constant byte address 0x4 - core index']
  #allocation1 [shape = 'u32[144,128]{1,0:T(1,128)}', space=vmem, size = 0x12000, scoped, tag = 'internal scratch']
  #allocation2 [shape = 'f32[16,384]{1,0:T(8,128)}', space=vmem, size = 0x6000, scoped, tag = 'scratch operand']
  #allocation3 [shape = 'f32[1,1]{1,0:T(1,128)S(1)}', space=vmem, size = 0x200, scoped, tag = 'scoped memory for subnet_fc_forward.1']
  %s0 = inlined_call_operand.vmem [shape: f32[4,17,768], index: 0, kind: input, shape index: {}]
  %s1 = inlined_call_operand.vmem [shape: f32[64,16], index: 1, kind: input, shape index: {}]
  %s2 = inlined_call_operand.vmem [shape: f32[64,1], index: 2, kind: input, shape index: {}]
  %s3 = inlined_call_operand.vmem [shape: f32[8,64], index: 3, kind: input, shape index: {}]
  %s4 = inlined_call_operand.<no memory space> [shape: f32[1,1], index: 4, kind: input, shape index: {}]
  %s5 = inlined_call_operand.vmem [shape: f32[1,768], index: 5, kind: output, shape index: {}]
  %s6 = sld [smem:[#allocation0]]
  $region76: #{subnet_fc_forward.1} parent=0
    _
  %s8 = ssub.s32 1, %s6
  %s9 = scalar_select 0, %s8, %s6
  %v10 = vstv %s4
  %11 = vst [vmem:[#allocation3] sm:$0x1] %v10
  $region1: #{subnet_fc_forward.1} parent=0
    #allocation4 [shape = 'u8[294912]{0}', space=vmem, size = 0x48000, scoped, tag = 'input window, operand 0']
    loop: start=0, step=1, limit=4
    $region2: #{subnet_fc_forward.1} parent=1 // loop_pre_header
      _
    $region3: #{subnet_fc_forward.1} parent=1 // loop_header
      %s13 = sphi 0, %s17
      %p14 = scmp.ge.s32.totalorder %s13, 4
      %s23 = sphi 0, %s25
      %s26 = sphi 0, %s23
      %s27 = sphi 0, %s26
      %s43 = sphi 0, %s27
      %s47 = sphi 0, %s47
      %s49 = sphi 0, %s47
      %s50 = sphi 0, %s49
      %s64 = sphi 0, %s50
      %s68 = sphi 0, %s68
      %s70 = sphi 0, %s68
      %s71 = sphi 0, %s70
      %s85 = sphi 0, %s71
      %s89 = sphi 0, %s89
      %s91 = sphi 0, %s89
      %s92 = sphi 0, %s91
      %s106 = sphi 0, %s92
      %s110 = sphi 0, %s110
      %s112 = sphi 0, %s110
      %s113 = sphi 0, %s112
      %s127 = sphi 0, %s113
      %s133 = sphi 0, %s135
      %s136 = sphi 0, %s133
      %s137 = sphi 0, %s136
      %s153 = sphi 0, %s137
    $region4: #{subnet_fc_forward.1} parent=1 // loop_header_branch
      %16 = sbr.rel (%p14) target = $region8
    $region5: #{subnet_fc_forward.1} parent=1 // loop_body
      %s18 = ssub.s32 %s13, 1
      %s19 = ssub.s32 %s13, 2
      %s20 = sadd.s32 %s13, 1
      %s21 = ssub.s32 %s13, %s20
      %p22 = scmp.eq.s32.totalorder %s21, 0
      %s24 = sadd.s32 %s23, 1
      %s25 = scalar_select %p22, %s23, %s24
      %p28 = pneg %p22
      %p29 = scmp.eq.s32.totalorder %s13, 1
      %p30 = por %p28, %p29
      %p31 = scmp.ne.s32.totalorder %s23, %s26
      %p32 = scmp.eq.s32.totalorder %s13, 0
      %p33 = por %p31, %p32
      %p34 = scmp.ne.s32.totalorder %s23, %s26
      %p35 = scmp.eq.s32.totalorder %s18, 1
      %p36 = por %p34, %p35
      %p37 = scmp.ne.s32.totalorder %s26, %s27
      %p38 = scmp.eq.s32.totalorder %s18, 0
      %p39 = por %p37, %p38
      %p40 = scmp.ne.s32.totalorder %s26, %s27
      %p41 = scmp.eq.s32.totalorder %s19, 1
      %p42 = por %p40, %p41
      %p44 = scmp.ne.s32.totalorder %s27, %s43
      %p45 = scmp.eq.s32.totalorder %s19, 0
      %p46 = por %p44, %p45
      %s48 = sadd.s32 %s47, 1
      %p51 = scmp.eq.s32.totalorder %s13, 1
      %p52 = scmp.ne.s32.totalorder %s47, %s49
      %p53 = scmp.eq.s32.totalorder %s13, 0
      %p54 = por %p52, %p53
      %p55 = scmp.ne.s32.totalorder %s47, %s49
      %p56 = scmp.eq.s32.totalorder %s18, 1
      %p57 = por %p55, %p56
      %p58 = scmp.ne.s32.totalorder %s49, %s50
      %p59 = scmp.eq.s32.totalorder %s18, 0
      %p60 = por %p58, %p59
      %p61 = scmp.ne.s32.totalorder %s49, %s50
      %p62 = scmp.eq.s32.totalorder %s19, 1
      %p63 = por %p61, %p62
      %p65 = scmp.ne.s32.totalorder %s50, %s64
      %p66 = scmp.eq.s32.totalorder %s19, 0
      %p67 = por %p65, %p66
      %s69 = sadd.s32 %s68, 1
      %p72 = scmp.eq.s32.totalorder %s13, 1
      %p73 = scmp.ne.s32.totalorder %s68, %s70
      %p74 = scmp.eq.s32.totalorder %s13, 0
      %p75 = por %p73, %p74
      %p76 = scmp.ne.s32.totalorder %s68, %s70
      %p77 = scmp.eq.s32.totalorder %s18, 1
      %p78 = por %p76, %p77
      %p79 = scmp.ne.s32.totalorder %s70, %s71
      %p80 = scmp.eq.s32.totalorder %s18, 0
      %p81 = por %p79, %p80
      %p82 = scmp.ne.s32.totalorder %s70, %s71
      %p83 = scmp.eq.s32.totalorder %s19, 1
      %p84 = por %p82, %p83
      %p86 = scmp.ne.s32.totalorder %s71, %s85
      %p87 = scmp.eq.s32.totalorder %s19, 0
      %p88 = por %p86, %p87
      %s90 = sadd.s32 %s89, 1
      %p93 = scmp.eq.s32.totalorder %s13, 1
      %p94 = scmp.ne.s32.totalorder %s89, %s91
      %p95 = scmp.eq.s32.totalorder %s13, 0
      %p96 = por %p94, %p95
      %p97 = scmp.ne.s32.totalorder %s89, %s91
      %p98 = scmp.eq.s32.totalorder %s18, 1
      %p99 = por %p97, %p98
      %p100 = scmp.ne.s32.totalorder %s91, %s92
      %p101 = scmp.eq.s32.totalorder %s18, 0
      %p102 = por %p100, %p101
      %p103 = scmp.ne.s32.totalorder %s91, %s92
      %p104 = scmp.eq.s32.totalorder %s19, 1
      %p105 = por %p103, %p104
      %p107 = scmp.ne.s32.totalorder %s92, %s106
      %p108 = scmp.eq.s32.totalorder %s19, 0
      %p109 = por %p107, %p108
      %s111 = sadd.s32 %s110, 1
      %p114 = scmp.eq.s32.totalorder %s13, 1
      %p115 = scmp.ne.s32.totalorder %s110, %s112
      %p116 = scmp.eq.s32.totalorder %s13, 0
      %p117 = por %p115, %p116
      %p118 = scmp.ne.s32.totalorder %s110, %s112
      %p119 = scmp.eq.s32.totalorder %s18, 1
      %p120 = por %p118, %p119
      %p121 = scmp.ne.s32.totalorder %s112, %s113
      %p122 = scmp.eq.s32.totalorder %s18, 0
      %p123 = por %p121, %p122
      %p124 = scmp.ne.s32.totalorder %s112, %s113
      %p125 = scmp.eq.s32.totalorder %s19, 1
      %p126 = por %p124, %p125
      %p128 = scmp.ne.s32.totalorder %s113, %s127
      %p129 = scmp.eq.s32.totalorder %s19, 0
      %p130 = por %p128, %p129
      %s131 = ssub.s32 %s13, %s20
      %p132 = scmp.eq.s32.totalorder %s131, 0
      %s134 = sadd.s32 %s133, 1
      %s135 = scalar_select %p132, %s133, %s134
      %p138 = pneg %p132
      %p139 = scmp.eq.s32.totalorder %s13, 1
      %p140 = por %p138, %p139
      %p141 = scmp.ne.s32.totalorder %s133, %s136
      %p142 = scmp.eq.s32.totalorder %s13, 0
      %p143 = por %p141, %p142
      %p144 = scmp.ne.s32.totalorder %s133, %s136
      %p145 = scmp.eq.s32.totalorder %s18, 1
      %p146 = por %p144, %p145
      %p147 = scmp.ne.s32.totalorder %s136, %s137
      %p148 = scmp.eq.s32.totalorder %s18, 0
      %p149 = por %p147, %p148
      %p150 = scmp.ne.s32.totalorder %s136, %s137
      %p151 = scmp.eq.s32.totalorder %s19, 1
      %p152 = por %p150, %p151
      %p154 = scmp.ne.s32.totalorder %s137, %s153
      %p155 = scmp.eq.s32.totalorder %s19, 0
      %p156 = por %p154, %p155
      %p157 = scmp.le.s32.totalorder 1, %s13
      %p158 = scmp.lt.s32.totalorder %s13, 3
      %p159 = pnand %p157, %p158
      %p160 = pneg %p159
      // Predicated region
      $region9: #{subnet_fc_forward.1} parent=5 // pred_check
        _
      $region10: #{subnet_fc_forward.1} parent=5 // pred_check_branch
        %162 = sbr.rel (%p159) target = $region12
      $region11: #{subnet_fc_forward.1} parent=5 // pred_region
        %s163 = ssub.s32 %s13, 1
        // Predicated region
        $region13: #{subnet_fc_forward.1} parent=11 // pred_check
          %p164 = pneg %p60
        $region14: #{subnet_fc_forward.1} parent=11 // pred_check_branch
          %166 = sbr.rel (%p164) target = $region16
        $region15: #{subnet_fc_forward.1} parent=11 // pred_region
          _
        $region16: #{subnet_fc_forward.1} parent=11 // pred_fallthru
          _
        // Predicated region
        $region17: #{subnet_fc_forward.1} parent=11 // pred_check
          %p167 = pneg %p81
        $region18: #{subnet_fc_forward.1} parent=11 // pred_check_branch
          %169 = sbr.rel (%p167) target = $region20
        $region19: #{subnet_fc_forward.1} parent=11 // pred_region
          _
        $region20: #{subnet_fc_forward.1} parent=11 // pred_fallthru
          _
        // Predicated region
        $region21: #{subnet_fc_forward.1} parent=11 // pred_check
          %p170 = pneg %p102
        $region22: #{subnet_fc_forward.1} parent=11 // pred_check_branch
          %172 = sbr.rel (%p170) target = $region24
        $region23: #{subnet_fc_forward.1} parent=11 // pred_region
          _
        $region24: #{subnet_fc_forward.1} parent=11 // pred_fallthru
          _
        // Predicated region
        $region25: #{subnet_fc_forward.1} parent=11 // pred_check
          %p173 = pneg %p123
        $region26: #{subnet_fc_forward.1} parent=11 // pred_check_branch
          %175 = sbr.rel (%p173) target = $region28
        $region27: #{subnet_fc_forward.1} parent=11 // pred_region
          _
        $region28: #{subnet_fc_forward.1} parent=11 // pred_fallthru
          _
      $region12: #{subnet_fc_forward.1} parent=5 // pred_fallthru
        _
      %p176 = scmp.lt.s32.totalorder %s13, 2
      // Predicated region
      $region29: #{subnet_fc_forward.1} parent=5 // pred_check
        %p177 = pneg %p176
      $region30: #{subnet_fc_forward.1} parent=5 // pred_check_branch
        %179 = sbr.rel (%p177) target = $region32
      $region31: #{subnet_fc_forward.1} parent=5 // pred_region
        // Predicated region
        $region33: #{subnet_fc_forward.1} parent=31 // pred_check
          %p180 = pneg %p33
        $region34: #{subnet_fc_forward.1} parent=31 // pred_check_branch
          %182 = sbr.rel (%p180) target = $region36
        $region35: #{subnet_fc_forward.1} parent=31 // pred_region
          %s183 = sand.u32 %s23, 1
          %s184 = sand.u32 %s23, 1
          %s185 = smul.addr %s184, 288
          %s186 = scalar_lea.vmem [#allocation4], %s185
          %s187 = smul.u32 3, %s13
          %s188 = smul.addr %s187, 8
          %s189 = scalar_lea.vmem %s0, %s188
          // Predicated region
          $region37: #{subnet_fc_forward.1} parent=35 // pred_check
            _
          $region38: #{subnet_fc_forward.1} parent=35 // pred_check_branch
            %191 = sbr.rel (0) target = $region40
          $region39: #{subnet_fc_forward.1} parent=35 // pred_region
            // Predicated region
            $region41: #{subnet_fc_forward.1} parent=39 // pred_check
              _
            $region42: #{subnet_fc_forward.1} parent=39 // pred_check_branch
              %193 = sbr.rel (0) target = $region44
            $region43: #{subnet_fc_forward.1} parent=39 // pred_region
              loop: start=0, step=1, limit=1
              $region45: #{subnet_fc_forward.1} parent=43 // loop_pre_header
                _
              $region46: #{subnet_fc_forward.1} parent=43 // loop_header
                %s195 = sphi 0, %s199
                %p196 = scmp.ge.s32.totalorder %s195, 1
                %s200 = sphi %s189, %s189
                %s201 = sphi %s186, %s186
              $region47: #{subnet_fc_forward.1} parent=43 // loop_header_branch
                %198 = sbr.rel (%p196) target = $region51
              $region48: #{subnet_fc_forward.1} parent=43 // loop_body
                %v202 = vld [vmem:[%s200] sm:$0xff]
                %203 = vst [vmem:[%s201] sm:$0xff] %v202
                %v204 = vld [vmem:[%s200 + $0x8] sm:$0xff]
                %205 = vst [vmem:[%s201 + $0x8] sm:$0xff] %v204
                %v206 = vld [vmem:[%s200 + $0x10] sm:$0xff]
                %207 = vst [vmem:[%s201 + $0x10] sm:$0xff] %v206
                %v208 = vld [vmem:[%s200 + $0x30] sm:$0xff]
                %209 = vst [vmem:[%s201 + $0x18] sm:$0xff] %v208
                %v210 = vld [vmem:[%s200 + $0x38] sm:$0xff]
                %211 = vst [vmem:[%s201 + $0x20] sm:$0xff] %v210
                %v212 = vld [vmem:[%s200 + $0x40] sm:$0xff]
                %213 = vst [vmem:[%s201 + $0x28] sm:$0xff] %v212
                %v214 = vld [vmem:[%s200 + $0x60] sm:$0xff]
                %215 = vst [vmem:[%s201 + $0x30] sm:$0xff] %v214
                %v216 = vld [vmem:[%s200 + $0x68] sm:$0xff]
                %217 = vst [vmem:[%s201 + $0x38] sm:$0xff] %v216
                %v218 = vld [vmem:[%s200 + $0x70] sm:$0xff]
                %219 = vst [vmem:[%s201 + $0x40] sm:$0xff] %v218
                %v220 = vld [vmem:[%s200 + $0x90] sm:$0xff]
                %221 = vst [vmem:[%s201 + $0x48] sm:$0xff] %v220
                %v222 = vld [vmem:[%s200 + $0x98] sm:$0xff]
                %223 = vst [vmem:[%s201 + $0x50] sm:$0xff] %v222
                %v224 = vld [vmem:[%s200 + $0xa0] sm:$0xff]
                %225 = vst [vmem:[%s201 + $0x58] sm:$0xff] %v224
                %v226 = vld [vmem:[%s200 + $0xc0] sm:$0xff]
                %227 = vst [vmem:[%s201 + $0x60] sm:$0xff] %v226
                %v228 = vld [vmem:[%s200 + $0xc8] sm:$0xff]
                %229 = vst [vmem:[%s201 + $0x68] sm:$0xff] %v228
                %v230 = vld [vmem:[%s200 + $0xd0] sm:$0xff]
                %231 = vst [vmem:[%s201 + $0x70] sm:$0xff] %v230
                %v232 = vld [vmem:[%s200 + $0xf0] sm:$0xff]
                %233 = vst [vmem:[%s201 + $0x78] sm:$0xff] %v232
                %v234 = vld [vmem:[%s200 + $0xf8] sm:$0xff]
                %235 = vst [vmem:[%s201 + $0x80] sm:$0xff] %v234
                %v236 = vld [vmem:[%s200 + $0x100] sm:$0xff]
                %237 = vst [vmem:[%s201 + $0x88] sm:$0xff] %v236
                %v238 = vld [vmem:[%s200 + $0x120] sm:$0xff]
                %239 = vst [vmem:[%s201 + $0x90] sm:$0xff] %v238
                %v240 = vld [vmem:[%s200 + $0x128] sm:$0xff]
                %241 = vst [vmem:[%s201 + $0x98] sm:$0xff] %v240
                %v242 = vld [vmem:[%s200 + $0x130] sm:$0xff]
                %243 = vst [vmem:[%s201 + $0xa0] sm:$0xff] %v242
                %v244 = vld [vmem:[%s200 + $0x150] sm:$0xff]
                %245 = vst [vmem:[%s201 + $0xa8] sm:$0xff] %v244
                %v246 = vld [vmem:[%s200 + $0x158] sm:$0xff]
                %247 = vst [vmem:[%s201 + $0xb0] sm:$0xff] %v246
                %v248 = vld [vmem:[%s200 + $0x160] sm:$0xff]
                %249 = vst [vmem:[%s201 + $0xb8] sm:$0xff] %v248
                %v250 = vld [vmem:[%s200 + $0x180] sm:$0xff]
                %251 = vst [vmem:[%s201 + $0xc0] sm:$0xff] %v250
                %v252 = vld [vmem:[%s200 + $0x188] sm:$0xff]
                %253 = vst [vmem:[%s201 + $0xc8] sm:$0xff] %v252
                %v254 = vld [vmem:[%s200 + $0x190] sm:$0xff]
                %255 = vst [vmem:[%s201 + $0xd0] sm:$0xff] %v254
                %v256 = vld [vmem:[%s200 + $0x1b0] sm:$0xff]
                %257 = vst [vmem:[%s201 + $0xd8] sm:$0xff] %v256
                %v258 = vld [vmem:[%s200 + $0x1b8] sm:$0xff]
                %259 = vst [vmem:[%s201 + $0xe0] sm:$0xff] %v258
                %v260 = vld [vmem:[%s200 + $0x1c0] sm:$0xff]
                %261 = vst [vmem:[%s201 + $0xe8] sm:$0xff] %v260
                %v262 = vld [vmem:[%s200 + $0x1e0] sm:$0xff]
                %263 = vst [vmem:[%s201 + $0xf0] sm:$0xff] %v262
                %v264 = vld [vmem:[%s200 + $0x1e8] sm:$0xff]
                %265 = vst [vmem:[%s201 + $0xf8] sm:$0xff] %v264
                %v266 = vld [vmem:[%s200 + $0x1f0] sm:$0xff]
                %267 = vst [vmem:[%s201 + $0x100] sm:$0xff] %v266
                %v268 = vld [vmem:[%s200 + $0x210] sm:$0xff]
                %269 = vst [vmem:[%s201 + $0x108] sm:$0xff] %v268
                %v270 = vld [vmem:[%s200 + $0x218] sm:$0xff]
                %271 = vst [vmem:[%s201 + $0x110] sm:$0xff] %v270
                %v272 = vld [vmem:[%s200 + $0x220] sm:$0xff]
                %273 = vst [vmem:[%s201 + $0x118] sm:$0xff] %v272
              $region49: #{subnet_fc_forward.1} parent=43 // loop_footer
                %s199 = sadd.s32 1, %s195
              $region50: #{subnet_fc_forward.1} parent=43 // loop_footer_branch
                %194 = sbr.rel target = $region46
              $region51: #{subnet_fc_forward.1} parent=43 // loop_exit
                _
            $region44: #{subnet_fc_forward.1} parent=39 // pred_fallthru
              _
            // Predicated region
            $region52: #{subnet_fc_forward.1} parent=39 // pred_check
              _
            $region53: #{subnet_fc_forward.1} parent=39 // pred_check_branch
              %275 = sbr.rel target = $region55
            $region54: #{subnet_fc_forward.1} parent=39 // pred_region
              _
            $region55: #{subnet_fc_forward.1} parent=39 // pred_fallthru
              _
          $region40: #{subnet_fc_forward.1} parent=35 // pred_fallthru
            _
          %276 = vnop
        $region36: #{subnet_fc_forward.1} parent=31 // pred_fallthru
          _
      $region32: #{subnet_fc_forward.1} parent=5 // pred_fallthru
        _
      %p277 = scmp.le.s32.totalorder 1, %s13
      %p278 = scmp.lt.s32.totalorder %s13, 3
      %p279 = pnand %p277, %p278
      %p280 = pneg %p279
      // Predicated region
      $region56: #{subnet_fc_forward.1} parent=5 // pred_check
        _
      $region57: #{subnet_fc_forward.1} parent=5 // pred_check_branch
        %282 = sbr.rel (%p279) target = $region59
      $region58: #{subnet_fc_forward.1} parent=5 // pred_region
        %s283 = ssub.s32 %s13, 1
        %s284 = sand.u32 %s26, 1
        %s285 = sand.u32 %s26, 1
        %s286 = smul.addr %s285, 288
        %s287 = scalar_lea.vmem [#allocation4], %s286
        // Predicated region
        $region60: #{subnet_fc_forward.1} parent=58 // pred_check
          %p288 = pneg %p39
        $region61: #{subnet_fc_forward.1} parent=58 // pred_check_branch
          %290 = sbr.rel (%p288) target = $region63
        $region62: #{subnet_fc_forward.1} parent=58 // pred_region
          _
        $region63: #{subnet_fc_forward.1} parent=58 // pred_fallthru
          _
        %s291 = sand.u32 %s26, 1
        %s292 = sand.u32 %s26, 1
        %s293 = smul.addr %s292, 288
        %s294 = scalar_lea.vmem [#allocation4], %s293
        %p295 = pneg %p39
        %p296 = pneg %p36
        %p297 = pneg %p60
        %p298 = pneg %p57
        %p299 = pneg %p81
        %p300 = pneg %p78
        %p301 = pneg %p102
        %p302 = pneg %p99
        %p303 = pneg %p123
        %p304 = pneg %p120
        %p305 = pneg %p149
        %p306 = pneg %p146
        %s307 = smul.u32 3, %s18
        %p308 = scmp.lt.s32.totalorder %s307, 5
        %s309 = scalar_select %p308, %s307, 5
        %s310 = scalar_lea.vmem %s5, %s309
        %s311 = smul.u32 3, %s18
        %s312 = smul.u32 3, %s18
        %p313 = scmp.lt.s32.totalorder %s312, 5
        %s314 = scalar_select %p313, %s312, 5
        %s315 = scalar_lea.vmem %s5, %s314
        %s316 = smul.u32 3, %s18
        %v317 = vld [vmem:[%s287] sm:$0xff]
        %v318 = vld [vmem:[%s287 + $0x8] sm:$0xff]
        %v319 = vld [vmem:[%s287 + $0x10] sm:$0xff]
        %v320 = vld [vmem:[%s287 + $0x18] sm:$0xff]
        %v321 = vld [vmem:[%s287 + $0x20] sm:$0xff]
        %v322 = vld [vmem:[%s287 + $0x28] sm:$0xff]
        %v323 = vld [vmem:[%s287 + $0x30] sm:$0x1]
        %v324 = vld [vmem:[%s287 + $0x38] sm:$0x1]
        %v325 = vld [vmem:[%s287 + $0x40] sm:$0x1]
        %vm326 = vcmask 1040384
        %v327 = vsel %vm326, %v323, -inf
        %v328 = vmax.f32 %v317, %v327
        %v329 = vmax.f32 %v328, %v320
        %v330 = vrot.slane %v329, 4
        %v331 = vmax.f32 %v329, %v330
        %v332 = vrot.slane %v331, 2
        %v333 = vmax.f32 %v331, %v332
        %v334 = vrot.slane %v333, 1
        %v335 = vmax.f32 %v333, %v334
        %v336 = vsel %vm326, %v324, -inf
        %v337 = vmax.f32 %v318, %v336
        %v338 = vmax.f32 %v337, %v321
        %v339 = vrot.slane %v338, 4
        %v340 = vmax.f32 %v338, %v339
        %v341 = vrot.slane %v340, 2
        %v342 = vmax.f32 %v340, %v341
        %v343 = vrot.slane %v342, 1
        %v344 = vmax.f32 %v342, %v343
        %v345 = vsel %vm326, %v325, -inf
        %v346 = vmax.f32 %v319, %v345
        %v347 = vmax.f32 %v346, %v322
        %v348 = vrot.slane %v347, 4
        %v349 = vmax.f32 %v347, %v348
        %v350 = vrot.slane %v349, 2
        %v351 = vmax.f32 %v349, %v350
        %v352 = vrot.slane %v351, 1
        %v353 = vmax.f32 %v351, %v352
        %v354 = vsub.f32 %v317, %v335
        %v355 = vsub.f32 %v318, %v344
        %v356 = vsub.f32 %v319, %v353
        %v357 = vsub.f32 %v320, %v335
        %v358 = vsub.f32 %v321, %v344
        %v359 = vsub.f32 %v322, %v353
        %v360 = vsub.f32 %v323, %v335
        %v361 = vsub.f32 %v324, %v344
        %v362 = vsub.f32 %v325, %v353
        %v363 = vmul.f32 %v354, 1.442695
        %v364 = vpow.pop %v363
        %v365 = vmul.f32 %v355, 1.442695
        %v366 = vpow.pop %v365
        %v367 = vmul.f32 %v356, 1.442695
        %v368 = vpow.pop %v367
        %v369 = vmul.f32 %v357, 1.442695
        %v370 = vpow.pop %v369
        %v371 = vmul.f32 %v358, 1.442695
        %v372 = vpow.pop %v371
        %v373 = vmul.f32 %v359, 1.442695
        %v374 = vpow.pop %v373
        %v375 = vmul.f32 %v360, 1.442695
        %v376 = vpow.pop %v375
        %v377 = vmul.f32 %v361, 1.442695
        %v378 = vpow.pop %v377
        %v379 = vmul.f32 %v362, 1.442695
        %v380 = vpow.pop %v379
        %v381 = vadd.f32 %v364, %v370
        %v382 = vsel %vm326, %v376, 0.0
        %v383 = vadd.f32 %v381, %v382
        %v384 = vrot.slane %v383, 4
        %v385 = vadd.f32 %v383, %v384
        %v386 = vrot.slane %v385, 2
        %v387 = vadd.f32 %v385, %v386
        %v388 = vrot.slane %v387, 1
        %v389 = vadd.f32 %v387, %v388
        %v390 = vadd.f32 %v366, %v372
        %v391 = vsel %vm326, %v378, 0.0
        %v392 = vadd.f32 %v390, %v391
        %v393 = vrot.slane %v392, 4
        %v394 = vadd.f32 %v392, %v393
        %v395 = vrot.slane %v394, 2
        %v396 = vadd.f32 %v394, %v395
        %v397 = vrot.slane %v396, 1
        %v398 = vadd.f32 %v396, %v397
        %v399 = vadd.f32 %v368, %v374
        %v400 = vsel %vm326, %v380, 0.0
        %v401 = vadd.f32 %v399, %v400
        %v402 = vrot.slane %v401, 4
        %v403 = vadd.f32 %v401, %v402
        %v404 = vrot.slane %v403, 2
        %v405 = vadd.f32 %v403, %v404
        %v406 = vrot.slane %v405, 1
        %v407 = vadd.f32 %v405, %v406
        %v408 = vrcp.pop %v389
        %v409 = vrcp.pop %v398
        %v410 = vrcp.pop %v407
        %vm411 = vcmp.eq.f32.partialorder %v364, 1.0
        %vm412 = vcmp.eq.f32.partialorder %v366, 1.0
        %vm413 = vcmp.eq.f32.partialorder %v368, 1.0
        %vm414 = vcmp.eq.f32.partialorder %v370, 1.0
        %vm415 = vcmp.eq.f32.partialorder %v372, 1.0
        %vm416 = vcmp.eq.f32.partialorder %v374, 1.0
        %vm417 = vcmp.eq.f32.partialorder %v376, 1.0
        %vm418 = vcmp.eq.f32.partialorder %v378, 1.0
        %vm419 = vcmp.eq.f32.partialorder %v380, 1.0
        %v420 = vsel %vm411, 0.0, %v364
        %v421 = vsel %vm412, 0.0, %v366
        %v422 = vsel %vm413, 0.0, %v368
        %v423 = vsel %vm414, 0.0, %v370
        %v424 = vsel %vm415, 0.0, %v372
        %v425 = vsel %vm416, 0.0, %v374
        %v426 = vsel %vm417, 0.0, %v376
        %v427 = vsel %vm418, 0.0, %v378
        %v428 = vsel %vm419, 0.0, %v380
        %v429 = vsel %vm326, %v426, -inf
        %v430 = vmax.f32 %v420, %v429
        %v431 = vmax.f32 %v430, %v423
        %v432 = vrot.slane %v431, 4
        %v433 = vmax.f32 %v431, %v432
        %v434 = vrot.slane %v433, 2
        %v435 = vmax.f32 %v433, %v434
        %v436 = vrot.slane %v435, 1
        %v437 = vmax.f32 %v435, %v436
        %v438 = vsel %vm326, %v427, -inf
        %v439 = vmax.f32 %v421, %v438
        %v440 = vmax.f32 %v439, %v424
        %v441 = vrot.slane %v440, 4
        %v442 = vmax.f32 %v440, %v441
        %v443 = vrot.slane %v442, 2
        %v444 = vmax.f32 %v442, %v443
        %v445 = vrot.slane %v444, 1
        %v446 = vmax.f32 %v444, %v445
        %v447 = vsel %vm326, %v428, -inf
        %v448 = vmax.f32 %v422, %v447
        %v449 = vmax.f32 %v448, %v425
        %v450 = vrot.slane %v449, 4
        %v451 = vmax.f32 %v449, %v450
        %v452 = vrot.slane %v451, 2
        %v453 = vmax.f32 %v451, %v452
        %v454 = vrot.slane %v453, 1
        %v455 = vmax.f32 %v453, %v454
        %v456 = vmul.f32 %v437, %v408
        %v457 = vmul.f32 %v446, %v409
        %v458 = vmul.f32 %v455, %v410
        %vm459 = vcmp.eq.f32.partialorder %v420, %v437
        %vm460 = vcmp.eq.f32.partialorder %v421, %v446
        %vm461 = vcmp.eq.f32.partialorder %v422, %v455
        %vm462 = vcmp.eq.f32.partialorder %v423, %v437
        %vm463 = vcmp.eq.f32.partialorder %v424, %v446
        %vm464 = vcmp.eq.f32.partialorder %v425, %v455
        %vm465 = vcmp.eq.f32.partialorder %v426, %v437
        %vm466 = vcmp.eq.f32.partialorder %v427, %v446
        %vm467 = vcmp.eq.f32.partialorder %v428, %v455
        %v468 = vsel %vm459, 0.0, %v420
        %v469 = vsel %vm460, 0.0, %v421
        %v470 = vsel %vm461, 0.0, %v422
        %v471 = vsel %vm462, 0.0, %v423
        %v472 = vsel %vm463, 0.0, %v424
        %v473 = vsel %vm464, 0.0, %v425
        %v474 = vsel %vm465, 0.0, %v426
        %v475 = vsel %vm466, 0.0, %v427
        %v476 = vsel %vm467, 0.0, %v428
        %v477 = vsel %vm326, %v474, -inf
        %v478 = vmax.f32 %v468, %v477
        %v479 = vmax.f32 %v478, %v471
        %v480 = vrot.slane %v479, 4
        %v481 = vmax.f32 %v479, %v480
        %v482 = vrot.slane %v481, 2
        %v483 = vmax.f32 %v481, %v482
        %v484 = vrot.slane %v483, 1
        %v485 = vmax.f32 %v483, %v484
        %v486 = vsel %vm326, %v475, -inf
        %v487 = vmax.f32 %v469, %v486
        %v488 = vmax.f32 %v487, %v472
        %v489 = vrot.slane %v488, 4
        %v490 = vmax.f32 %v488, %v489
        %v491 = vrot.slane %v490, 2
        %v492 = vmax.f32 %v490, %v491
        %v493 = vrot.slane %v492, 1
        %v494 = vmax.f32 %v492, %v493
        %v495 = vsel %vm326, %v476, -inf
        %v496 = vmax.f32 %v470, %v495
        %v497 = vmax.f32 %v496, %v473
        %v498 = vrot.slane %v497, 4
        %v499 = vmax.f32 %v497, %v498
        %v500 = vrot.slane %v499, 2
        %v501 = vmax.f32 %v499, %v500
        %v502 = vrot.slane %v501, 1
        %v503 = vmax.f32 %v501, %v502
        %v504 = vmul.f32 %v485, %v408
        %v505 = vmul.f32 %v494, %v409
        %v506 = vmul.f32 %v503, %v410
        %vm507 = vcmp.eq.f32.partialorder %v468, %v485
        %vm508 = vcmp.eq.f32.partialorder %v469, %v494
        %vm509 = vcmp.eq.f32.partialorder %v470, %v503
        %vm510 = vcmp.eq.f32.partialorder %v471, %v485
        %vm511 = vcmp.eq.f32.partialorder %v472, %v494
        %vm512 = vcmp.eq.f32.partialorder %v473, %v503
        %vm513 = vcmp.eq.f32.partialorder %v474, %v485
        %vm514 = vcmp.eq.f32.partialorder %v475, %v494
        %vm515 = vcmp.eq.f32.partialorder %v476, %v503
        %v516 = vsel %vm507, 0.0, %v468
        %v517 = vsel %vm508, 0.0, %v469
        %v518 = vsel %vm509, 0.0, %v470
        %v519 = vsel %vm510, 0.0, %v471
        %v520 = vsel %vm511, 0.0, %v472
        %v521 = vsel %vm512, 0.0, %v473
        %v522 = vsel %vm513, 0.0, %v474
        %v523 = vsel %vm514, 0.0, %v475
        %v524 = vsel %vm515, 0.0, %v476
        %v525 = vsel %vm326, %v522, -inf
        %v526 = vmax.f32 %v516, %v525
        %v527 = vmax.f32 %v526, %v519
        %v528 = vrot.slane %v527, 4
        %v529 = vmax.f32 %v527, %v528
        %v530 = vrot.slane %v529, 2
        %v531 = vmax.f32 %v529, %v530
        %v532 = vrot.slane %v531, 1
        %v533 = vmax.f32 %v531, %v532
        %v534 = vsel %vm326, %v523, -inf
        %v535 = vmax.f32 %v517, %v534
        %v536 = vmax.f32 %v535, %v520
        %v537 = vrot.slane %v536, 4
        %v538 = vmax.f32 %v536, %v537
        %v539 = vrot.slane %v538, 2
        %v540 = vmax.f32 %v538, %v539
        %v541 = vrot.slane %v540, 1
        %v542 = vmax.f32 %v540, %v541
        %v543 = vsel %vm326, %v524, -inf
        %v544 = vmax.f32 %v518, %v543
        %v545 = vmax.f32 %v544, %v521
        %v546 = vrot.slane %v545, 4
        %v547 = vmax.f32 %v545, %v546
        %v548 = vrot.slane %v547, 2
        %v549 = vmax.f32 %v547, %v548
        %v550 = vrot.slane %v549, 1
        %v551 = vmax.f32 %v549, %v550
        %v552 = vmul.f32 %v533, %v408
        %v553 = vmul.f32 %v542, %v409
        %v554 = vmul.f32 %v551, %v410
        %v558 = vcombine.low %v408, %v409
        %v560 = vunpack.c.l.s4 1966171168
        %v561 = vunpack.c.0.s8 %v560
        %v562 = vlaneseq
        %v563 = vshrl.u32 %v562, 7
        %v564 = vsub.s32 %v561, %v563
        %v565 = vrot.slane %v558, %v564
        %v567 = vunpack.c.l.s4 1966171168
        %v568 = vunpack.c.0.s8 %v567
        %v569 = vlaneseq
        %v570 = vshrl.u32 %v569, 7
        %v571 = vsub.s32 %v568, %v570
        %v572 = vrot.slane %v410, %v571
        %v573 = vcombine.low %v565, %v572
        %v575 = vunpack.c.l.s4 1966171168
        %v576 = vunpack.c.0.s8 %v575
        %v577 = vlaneseq
        %v578 = vshrl.u32 %v577, 7
        %v579 = vsub.s32 %v576, %v578
        %v580 = vrot.slane %v573, %v579
        %v582 = vlaneseq
        %vm583 = vcmp.ge.s32.totalorder %v582, 0
        %vm584 = vcmp.lt.s32.totalorder %v582, 384
        %vm585 = vmand %vm583, %vm584
        %586 = vst.msk [vmem:[#allocation2] ss:$8 sm:$0x7] %vm585, %v580
        %587 = vst.msk [vmem:[#allocation2] ss:$8 sm:$0x0] %vm585, %v580
        %v591 = vcombine.low %v456, %v457
        %v593 = vunpack.c.l.s4 1966171168
        %v594 = vunpack.c.0.s8 %v593
        %v595 = vlaneseq
        %v596 = vshrl.u32 %v595, 7
        %v597 = vsub.s32 %v594, %v596
        %v598 = vrot.slane %v591, %v597
        %v600 = vunpack.c.l.s4 1966171168
        %v601 = vunpack.c.0.s8 %v600
        %v602 = vlaneseq
        %v603 = vshrl.u32 %v602, 7
        %v604 = vsub.s32 %v601, %v603
        %v605 = vrot.slane %v458, %v604
        %v606 = vcombine.low %v598, %v605
        %v608 = vunpack.c.l.s4 1966171168
        %v609 = vunpack.c.0.s8 %v608
        %v610 = vlaneseq
        %v611 = vshrl.u32 %v610, 7
        %v612 = vsub.s32 %v609, %v611
        %v613 = vrot.slane %v606, %v612
        %s615 = scalar_lea.vmem [#allocation2], 1
        %616 = vst.msk [vmem:[%s615] ss:$8 sm:$0x7] %vm585, %v613
        %617 = vst.msk [vmem:[%s615] ss:$8 sm:$0x0] %vm585, %v613
        %v621 = vcombine.low %v504, %v505
        %v623 = vunpack.c.l.s4 1966171168
        %v624 = vunpack.c.0.s8 %v623
        %v625 = vlaneseq
        %v626 = vshrl.u32 %v625, 7
        %v627 = vsub.s32 %v624, %v626
        %v628 = vrot.slane %v621, %v627
        %v630 = vunpack.c.l.s4 1966171168
        %v631 = vunpack.c.0.s8 %v630
        %v632 = vlaneseq
        %v633 = vshrl.u32 %v632, 7
        %v634 = vsub.s32 %v631, %v633
        %v635 = vrot.slane %v506, %v634
        %v636 = vcombine.low %v628, %v635
        %v638 = vunpack.c.l.s4 1966171168
        %v639 = vunpack.c.0.s8 %v638
        %v640 = vlaneseq
        %v641 = vshrl.u32 %v640, 7
        %v642 = vsub.s32 %v639, %v641
        %v643 = vrot.slane %v636, %v642
        %s645 = scalar_lea.vmem [#allocation2], 2
        %646 = vst.msk [vmem:[%s645] ss:$8 sm:$0x7] %vm585, %v643
        %647 = vst.msk [vmem:[%s645] ss:$8 sm:$0x0] %vm585, %v643
        %v651 = vcombine.low %v552, %v553
        %v653 = vunpack.c.l.s4 1966171168
        %v654 = vunpack.c.0.s8 %v653
        %v655 = vlaneseq
        %v656 = vshrl.u32 %v655, 7
        %v657 = vsub.s32 %v654, %v656
        %v658 = vrot.slane %v651, %v657
        %v660 = vunpack.c.l.s4 1966171168
        %v661 = vunpack.c.0.s8 %v660
        %v662 = vlaneseq
        %v663 = vshrl.u32 %v662, 7
        %v664 = vsub.s32 %v661, %v663
        %v665 = vrot.slane %v554, %v664
        %v666 = vcombine.low %v658, %v665
        %v668 = vunpack.c.l.s4 1966171168
        %v669 = vunpack.c.0.s8 %v668
        %v670 = vlaneseq
        %v671 = vshrl.u32 %v670, 7
        %v672 = vsub.s32 %v669, %v671
        %v673 = vrot.slane %v666, %v672
        %s675 = scalar_lea.vmem [#allocation2], 3
        %676 = vst.msk [vmem:[%s675] ss:$8 sm:$0x7] %vm585, %v673
        %677 = vst.msk [vmem:[%s675] ss:$8 sm:$0x0] %vm585, %v673
        %s678 = scalar_lea.vmem %s287, 72 [#allocation4]
        %v679 = vld [vmem:[%s678] sm:$0xff]
        %v680 = vld [vmem:[%s678 + $0x8] sm:$0xff]
        %v681 = vld [vmem:[%s678 + $0x10] sm:$0xff]
        %v682 = vld [vmem:[%s678 + $0x18] sm:$0xff]
        %v683 = vld [vmem:[%s678 + $0x20] sm:$0xff]
        %v684 = vld [vmem:[%s678 + $0x28] sm:$0xff]
        %v685 = vld [vmem:[%s678 + $0x30] sm:$0x1]
        %v686 = vld [vmem:[%s678 + $0x38] sm:$0x1]
        %v687 = vld [vmem:[%s678 + $0x40] sm:$0x1]
        %v688 = vsel %vm326, %v685, -inf
        %v689 = vmax.f32 %v679, %v688
        %v690 = vmax.f32 %v689, %v682
        %v691 = vrot.slane %v690, 4
        %v692 = vmax.f32 %v690, %v691
        %v693 = vrot.slane %v692, 2
        %v694 = vmax.f32 %v692, %v693
        %v695 = vrot.slane %v694, 1
        %v696 = vmax.f32 %v694, %v695
        %v697 = vsel %vm326, %v686, -inf
        %v698 = vmax.f32 %v680, %v697
        %v699 = vmax.f32 %v698, %v683
        %v700 = vrot.slane %v699, 4
        %v701 = vmax.f32 %v699, %v700
        %v702 = vrot.slane %v701, 2
        %v703 = vmax.f32 %v701, %v702
        %v704 = vrot.slane %v703, 1
        %v705 = vmax.f32 %v703, %v704
        %v706 = vsel %vm326, %v687, -inf
        %v707 = vmax.f32 %v681, %v706
        %v708 = vmax.f32 %v707, %v684
        %v709 = vrot.slane %v708, 4
        %v710 = vmax.f32 %v708, %v709
        %v711 = vrot.slane %v710, 2
        %v712 = vmax.f32 %v710, %v711
        %v713 = vrot.slane %v712, 1
        %v714 = vmax.f32 %v712, %v713
        %v715 = vsub.f32 %v679, %v696
        %v716 = vsub.f32 %v680, %v705
        %v717 = vsub.f32 %v681, %v714
        %v718 = vsub.f32 %v682, %v696
        %v719 = vsub.f32 %v683, %v705
        %v720 = vsub.f32 %v684, %v714
        %v721 = vsub.f32 %v685, %v696
        %v722 = vsub.f32 %v686, %v705
        %v723 = vsub.f32 %v687, %v714
        %v724 = vmul.f32 %v715, 1.442695
        %v725 = vpow.pop %v724
        %v726 = vmul.f32 %v716, 1.442695
        %v727 = vpow.pop %v726
        %v728 = vmul.f32 %v717, 1.442695
        %v729 = vpow.pop %v728
        %v730 = vmul.f32 %v718, 1.442695
        %v731 = vpow.pop %v730
        %v732 = vmul.f32 %v719, 1.442695
        %v733 = vpow.pop %v732
        %v734 = vmul.f32 %v720, 1.442695
        %v735 = vpow.pop %v734
        %v736 = vmul.f32 %v721, 1.442695
        %v737 = vpow.pop %v736
        %v738 = vmul.f32 %v722, 1.442695
        %v739 = vpow.pop %v738
        %v740 = vmul.f32 %v723, 1.442695
        %v741 = vpow.pop %v740
        %v742 = vadd.f32 %v725, %v731
        %v743 = vsel %vm326, %v737, 0.0
        %v744 = vadd.f32 %v742, %v743
        %v745 = vrot.slane %v744, 4
        %v746 = vadd.f32 %v744, %v745
        %v747 = vrot.slane %v746, 2
        %v748 = vadd.f32 %v746, %v747
        %v749 = vrot.slane %v748, 1
        %v750 = vadd.f32 %v748, %v749
        %v751 = vadd.f32 %v727, %v733
        %v752 = vsel %vm326, %v739, 0.0
        %v753 = vadd.f32 %v751, %v752
        %v754 = vrot.slane %v753, 4
        %v755 = vadd.f32 %v753, %v754
        %v756 = vrot.slane %v755, 2
        %v757 = vadd.f32 %v755, %v756
        %v758 = vrot.slane %v757, 1
        %v759 = vadd.f32 %v757, %v758
        %v760 = vadd.f32 %v729, %v735
        %v761 = vsel %vm326, %v741, 0.0
        %v762 = vadd.f32 %v760, %v761
        %v763 = vrot.slane %v762, 4
        %v764 = vadd.f32 %v762, %v763
        %v765 = vrot.slane %v764, 2
        %v766 = vadd.f32 %v764, %v765
        %v767 = vrot.slane %v766, 1
        %v768 = vadd.f32 %v766, %v767
        %v769 = vrcp.pop %v750
        %v770 = vrcp.pop %v759
        %v771 = vrcp.pop %v768
        %vm772 = vcmp.eq.f32.partialorder %v725, 1.0
        %vm773 = vcmp.eq.f32.partialorder %v727, 1.0
        %vm774 = vcmp.eq.f32.partialorder %v729, 1.0
        %vm775 = vcmp.eq.f32.partialorder %v731, 1.0
        %vm776 = vcmp.eq.f32.partialorder %v733, 1.0
        %vm777 = vcmp.eq.f32.partialorder %v735, 1.0
        %vm778 = vcmp.eq.f32.partialorder %v737, 1.0
        %vm779 = vcmp.eq.f32.partialorder %v739, 1.0
        %vm780 = vcmp.eq.f32.partialorder %v741, 1.0
        %v781 = vsel %vm772, 0.0, %v725
        %v782 = vsel %vm773, 0.0, %v727
        %v783 = vsel %vm774, 0.0, %v729
        %v784 = vsel %vm775, 0.0, %v731
        %v785 = vsel %vm776, 0.0, %v733
        %v786 = vsel %vm777, 0.0, %v735
        %v787 = vsel %vm778, 0.0, %v737
        %v788 = vsel %vm779, 0.0, %v739
        %v789 = vsel %vm780, 0.0, %v741
        %v790 = vsel %vm326, %v787, -inf
        %v791 = vmax.f32 %v781, %v790
        %v792 = vmax.f32 %v791, %v784
        %v793 = vrot.slane %v792, 4
        %v794 = vmax.f32 %v792, %v793
        %v795 = vrot.slane %v794, 2
        %v796 = vmax.f32 %v794, %v795
        %v797 = vrot.slane %v796, 1
        %v798 = vmax.f32 %v796, %v797
        %v799 = vsel %vm326, %v788, -inf
        %v800 = vmax.f32 %v782, %v799
        %v801 = vmax.f32 %v800, %v785
        %v802 = vrot.slane %v801, 4
        %v803 = vmax.f32 %v801, %v802
        %v804 = vrot.slane %v803, 2
        %v805 = vmax.f32 %v803, %v804
        %v806 = vrot.slane %v805, 1
        %v807 = vmax.f32 %v805, %v806
        %v808 = vsel %vm326, %v789, -inf
        %v809 = vmax.f32 %v783, %v808
        %v810 = vmax.f32 %v809, %v786
        %v811 = vrot.slane %v810, 4
        %v812 = vmax.f32 %v810, %v811
        %v813 = vrot.slane %v812, 2
        %v814 = vmax.f32 %v812, %v813
        %v815 = vrot.slane %v814, 1
        %v816 = vmax.f32 %v814, %v815
        %v817 = vmul.f32 %v798, %v769
        %v818 = vmul.f32 %v807, %v770
        %v819 = vmul.f32 %v816, %v771
        %vm820 = vcmp.eq.f32.partialorder %v781, %v798
        %vm821 = vcmp.eq.f32.partialorder %v782, %v807
        %vm822 = vcmp.eq.f32.partialorder %v783, %v816
        %vm823 = vcmp.eq.f32.partialorder %v784, %v798
        %vm824 = vcmp.eq.f32.partialorder %v785, %v807
        %vm825 = vcmp.eq.f32.partialorder %v786, %v816
        %vm826 = vcmp.eq.f32.partialorder %v787, %v798
        %vm827 = vcmp.eq.f32.partialorder %v788, %v807
        %vm828 = vcmp.eq.f32.partialorder %v789, %v816
        %v829 = vsel %vm820, 0.0, %v781
        %v830 = vsel %vm821, 0.0, %v782
        %v831 = vsel %vm822, 0.0, %v783
        %v832 = vsel %vm823, 0.0, %v784
        %v833 = vsel %vm824, 0.0, %v785
        %v834 = vsel %vm825, 0.0, %v786
        %v835 = vsel %vm826, 0.0, %v787
        %v836 = vsel %vm827, 0.0, %v788
        %v837 = vsel %vm828, 0.0, %v789
        %v838 = vsel %vm326, %v835, -inf
        %v839 = vmax.f32 %v829, %v838
        %v840 = vmax.f32 %v839, %v832
        %v841 = vrot.slane %v840, 4
        %v842 = vmax.f32 %v840, %v841
        %v843 = vrot.slane %v842, 2
        %v844 = vmax.f32 %v842, %v843
        %v845 = vrot.slane %v844, 1
        %v846 = vmax.f32 %v844, %v845
        %v847 = vsel %vm326, %v836, -inf
        %v848 = vmax.f32 %v830, %v847
        %v849 = vmax.f32 %v848, %v833
        %v850 = vrot.slane %v849, 4
        %v851 = vmax.f32 %v849, %v850
        %v852 = vrot.slane %v851, 2
        %v853 = vmax.f32 %v851, %v852
        %v854 = vrot.slane %v853, 1
        %v855 = vmax.f32 %v853, %v854
        %v856 = vsel %vm326, %v837, -inf
        %v857 = vmax.f32 %v831, %v856
        %v858 = vmax.f32 %v857, %v834
        %v859 = vrot.slane %v858, 4
        %v860 = vmax.f32 %v858, %v859
        %v861 = vrot.slane %v860, 2
        %v862 = vmax.f32 %v860, %v861
        %v863 = vrot.slane %v862, 1
        %v864 = vmax.f32 %v862, %v863
        %v865 = vmul.f32 %v846, %v769
        %v866 = vmul.f32 %v855, %v770
        %v867 = vmul.f32 %v864, %v771
        %vm868 = vcmp.eq.f32.partialorder %v829, %v846
        %vm869 = vcmp.eq.f32.partialorder %v830, %v855
        %vm870 = vcmp.eq.f32.partialorder %v831, %v864
        %vm871 = vcmp.eq.f32.partialorder %v832, %v846
        %vm872 = vcmp.eq.f32.partialorder %v833, %v855
        %vm873 = vcmp.eq.f32.partialorder %v834, %v864
        %vm874 = vcmp.eq.f32.partialorder %v835, %v846
        %vm875 = vcmp.eq.f32.partialorder %v836, %v855
        %vm876 = vcmp.eq.f32.partialorder %v837, %v864
        %v877 = vsel %vm868, 0.0, %v829
        %v878 = vsel %vm869, 0.0, %v830
        %v879 = vsel %vm870, 0.0, %v831
        %v880 = vsel %vm871, 0.0, %v832
        %v881 = vsel %vm872, 0.0, %v833
        %v882 = vsel %vm873, 0.0, %v834
        %v883 = vsel %vm874, 0.0, %v835
        %v884 = vsel %vm875, 0.0, %v836
        %v885 = vsel %vm876, 0.0, %v837
        %v886 = vsel %vm326, %v883, -inf
        %v887 = vmax.f32 %v877, %v886
        %v888 = vmax.f32 %v887, %v880
        %v889 = vrot.slane %v888, 4
        %v890 = vmax.f32 %v888, %v889
        %v891 = vrot.slane %v890, 2
        %v892 = vmax.f32 %v890, %v891
        %v893 = vrot.slane %v892, 1
        %v894 = vmax.f32 %v892, %v893
        %v895 = vsel %vm326, %v884, -inf
        %v896 = vmax.f32 %v878, %v895
        %v897 = vmax.f32 %v896, %v881
        %v898 = vrot.slane %v897, 4
        %v899 = vmax.f32 %v897, %v898
        %v900 = vrot.slane %v899, 2
        %v901 = vmax.f32 %v899, %v900
        %v902 = vrot.slane %v901, 1
        %v903 = vmax.f32 %v901, %v902
        %v904 = vsel %vm326, %v885, -inf
        %v905 = vmax.f32 %v879, %v904
        %v906 = vmax.f32 %v905, %v882
        %v907 = vrot.slane %v906, 4
        %v908 = vmax.f32 %v906, %v907
        %v909 = vrot.slane %v908, 2
        %v910 = vmax.f32 %v908, %v909
        %v911 = vrot.slane %v910, 1
        %v912 = vmax.f32 %v910, %v911
        %v913 = vmul.f32 %v894, %v769
        %v914 = vmul.f32 %v903, %v770
        %v915 = vmul.f32 %v912, %v771
        %v919 = vcombine.low %v769, %v770
        %v921 = vunpack.c.l.s4 1966171168
        %v922 = vunpack.c.0.s8 %v921
        %v923 = vlaneseq
        %v924 = vshrl.u32 %v923, 7
        %v925 = vsub.s32 %v922, %v924
        %v926 = vrot.slane %v919, %v925
        %v928 = vunpack.c.l.s4 1966171168
        %v929 = vunpack.c.0.s8 %v928
        %v930 = vlaneseq
        %v931 = vshrl.u32 %v930, 7
        %v932 = vsub.s32 %v929, %v931
        %v933 = vrot.slane %v771, %v932
        %v934 = vcombine.low %v926, %v933
        %v936 = vunpack.c.l.s4 1966171168
        %v937 = vunpack.c.0.s8 %v936
        %v938 = vlaneseq
        %v939 = vshrl.u32 %v938, 7
        %v940 = vsub.s32 %v937, %v939
        %v941 = vrot.slane %v934, %v940
        %s943 = scalar_lea.vmem [#allocation2], 4
        %944 = vst.msk [vmem:[%s943] ss:$8 sm:$0x7] %vm585, %v941
        %945 = vst.msk [vmem:[%s943] ss:$8 sm:$0x0] %vm585, %v941
        %v949 = vcombine.low %v817, %v818
        %v951 = vunpack.c.l.s4 1966171168
        %v952 = vunpack.c.0.s8 %v951
        %v953 = vlaneseq
        %v954 = vshrl.u32 %v953, 7
        %v955 = vsub.s32 %v952, %v954
        %v956 = vrot.slane %v949, %v955
        %v958 = vunpack.c.l.s4 1966171168
        %v959 = vunpack.c.0.s8 %v958
        %v960 = vlaneseq
        %v961 = vshrl.u32 %v960, 7
        %v962 = vsub.s32 %v959, %v961
        %v963 = vrot.slane %v819, %v962
        %v964 = vcombine.low %v956, %v963
        %v966 = vunpack.c.l.s4 1966171168
        %v967 = vunpack.c.0.s8 %v966
        %v968 = vlaneseq
        %v969 = vshrl.u32 %v968, 7
        %v970 = vsub.s32 %v967, %v969
        %v971 = vrot.slane %v964, %v970
        %s973 = scalar_lea.vmem [#allocation2], 5
        %974 = vst.msk [vmem:[%s973] ss:$8 sm:$0x7] %vm585, %v971
        %975 = vst.msk [vmem:[%s973] ss:$8 sm:$0x0] %vm585, %v971
        %v979 = vcombine.low %v865, %v866
        %v981 = vunpack.c.l.s4 1966171168
        %v982 = vunpack.c.0.s8 %v981
        %v983 = vlaneseq
        %v984 = vshrl.u32 %v983, 7
        %v985 = vsub.s32 %v982, %v984
        %v986 = vrot.slane %v979, %v985
        %v988 = vunpack.c.l.s4 1966171168
        %v989 = vunpack.c.0.s8 %v988
        %v990 = vlaneseq
        %v991 = vshrl.u32 %v990, 7
        %v992 = vsub.s32 %v989, %v991
        %v993 = vrot.slane %v867, %v992
        %v994 = vcombine.low %v986, %v993
        %v996 = vunpack.c.l.s4 1966171168
        %v997 = vunpack.c.0.s8 %v996
        %v998 = vlaneseq
        %v999 = vshrl.u32 %v998, 7
        %v1000 = vsub.s32 %v997, %v999
        %v1001 = vrot.slane %v994, %v1000
        %s1003 = scalar_lea.vmem [#allocation2], 6
        %1004 = vst.msk [vmem:[%s1003] ss:$8 sm:$0x7] %vm585, %v1001
        %1005 = vst.msk [vmem:[%s1003] ss:$8 sm:$0x0] %vm585, %v1001
        %v1009 = vcombine.low %v913, %v914
        %v1011 = vunpack.c.l.s4 1966171168
        %v1012 = vunpack.c.0.s8 %v1011
        %v1013 = vlaneseq
        %v1014 = vshrl.u32 %v1013, 7
        %v1015 = vsub.s32 %v1012, %v1014
        %v1016 = vrot.slane %v1009, %v1015
        %v1018 = vunpack.c.l.s4 1966171168
        %v1019 = vunpack.c.0.s8 %v1018
        %v1020 = vlaneseq
        %v1021 = vshrl.u32 %v1020, 7
        %v1022 = vsub.s32 %v1019, %v1021
        %v1023 = vrot.slane %v915, %v1022
        %v1024 = vcombine.low %v1016, %v1023
        %v1026 = vunpack.c.l.s4 1966171168
        %v1027 = vunpack.c.0.s8 %v1026
        %v1028 = vlaneseq
        %v1029 = vshrl.u32 %v1028, 7
        %v1030 = vsub.s32 %v1027, %v1029
        %v1031 = vrot.slane %v1024, %v1030
        %s1033 = scalar_lea.vmem [#allocation2], 7
        %1034 = vst.msk [vmem:[%s1033] ss:$8 sm:$0x7] %vm585, %v1031
        %1035 = vst.msk [vmem:[%s1033] ss:$8 sm:$0x0] %vm585, %v1031
        %s1036 = scalar_lea.vmem %s287, 144 [#allocation4]
        %v1037 = vld [vmem:[%s1036] sm:$0xff]
        %v1038 = vld [vmem:[%s1036 + $0x8] sm:$0xff]
        %v1039 = vld [vmem:[%s1036 + $0x10] sm:$0xff]
        %v1040 = vld [vmem:[%s1036 + $0x18] sm:$0xff]
        %v1041 = vld [vmem:[%s1036 + $0x20] sm:$0xff]
        %v1042 = vld [vmem:[%s1036 + $0x28] sm:$0xff]
        %v1043 = vld [vmem:[%s1036 + $0x30] sm:$0x1]
        %v1044 = vld [vmem:[%s1036 + $0x38] sm:$0x1]
        %v1045 = vld [vmem:[%s1036 + $0x40] sm:$0x1]
        %v1046 = vsel %vm326, %v1043, -inf
        %v1047 = vmax.f32 %v1037, %v1046
        %v1048 = vmax.f32 %v1047, %v1040
        %v1049 = vrot.slane %v1048, 4
        %v1050 = vmax.f32 %v1048, %v1049
        %v1051 = vrot.slane %v1050, 2
        %v1052 = vmax.f32 %v1050, %v1051
        %v1053 = vrot.slane %v1052, 1
        %v1054 = vmax.f32 %v1052, %v1053
        %v1055 = vsel %vm326, %v1044, -inf
        %v1056 = vmax.f32 %v1038, %v1055
        %v1057 = vmax.f32 %v1056, %v1041
        %v1058 = vrot.slane %v1057, 4
        %v1059 = vmax.f32 %v1057, %v1058
        %v1060 = vrot.slane %v1059, 2
        %v1061 = vmax.f32 %v1059, %v1060
        %v1062 = vrot.slane %v1061, 1
        %v1063 = vmax.f32 %v1061, %v1062
        %v1064 = vsel %vm326, %v1045, -inf
        %v1065 = vmax.f32 %v1039, %v1064
        %v1066 = vmax.f32 %v1065, %v1042
        %v1067 = vrot.slane %v1066, 4
        %v1068 = vmax.f32 %v1066, %v1067
        %v1069 = vrot.slane %v1068, 2
        %v1070 = vmax.f32 %v1068, %v1069
        %v1071 = vrot.slane %v1070, 1
        %v1072 = vmax.f32 %v1070, %v1071
        %v1073 = vsub.f32 %v1037, %v1054
        %v1074 = vsub.f32 %v1038, %v1063
        %v1075 = vsub.f32 %v1039, %v1072
        %v1076 = vsub.f32 %v1040, %v1054
        %v1077 = vsub.f32 %v1041, %v1063
        %v1078 = vsub.f32 %v1042, %v1072
        %v1079 = vsub.f32 %v1043, %v1054
        %v1080 = vsub.f32 %v1044, %v1063
        %v1081 = vsub.f32 %v1045, %v1072
        %v1082 = vmul.f32 %v1073, 1.442695
        %v1083 = vpow.pop %v1082
        %v1084 = vmul.f32 %v1074, 1.442695
        %v1085 = vpow.pop %v1084
        %v1086 = vmul.f32 %v1075, 1.442695
        %v1087 = vpow.pop %v1086
        %v1088 = vmul.f32 %v1076, 1.442695
        %v1089 = vpow.pop %v1088
        %v1090 = vmul.f32 %v1077, 1.442695
        %v1091 = vpow.pop %v1090
        %v1092 = vmul.f32 %v1078, 1.442695
        %v1093 = vpow.pop %v1092
        %v1094 = vmul.f32 %v1079, 1.442695
        %v1095 = vpow.pop %v1094
        %v1096 = vmul.f32 %v1080, 1.442695
        %v1097 = vpow.pop %v1096
        %v1098 = vmul.f32 %v1081, 1.442695
        %v1099 = vpow.pop %v1098
        %v1100 = vadd.f32 %v1083, %v1089
        %v1101 = vsel %vm326, %v1095, 0.0
        %v1102 = vadd.f32 %v1100, %v1101
        %v1103 = vrot.slane %v1102, 4
        %v1104 = vadd.f32 %v1102, %v1103
        %v1105 = vrot.slane %v1104, 2
        %v1106 = vadd.f32 %v1104, %v1105
        %v1107 = vrot.slane %v1106, 1
        %v1108 = vadd.f32 %v1106, %v1107
        %v1109 = vadd.f32 %v1085, %v1091
        %v1110 = vsel %vm326, %v1097, 0.0
        %v1111 = vadd.f32 %v1109, %v1110
        %v1112 = vrot.slane %v1111, 4
        %v1113 = vadd.f32 %v1111, %v1112
        %v1114 = vrot.slane %v1113, 2
        %v1115 = vadd.f32 %v1113, %v1114
        %v1116 = vrot.slane %v1115, 1
        %v1117 = vadd.f32 %v1115, %v1116
        %v1118 = vadd.f32 %v1087, %v1093
        %v1119 = vsel %vm326, %v1099, 0.0
        %v1120 = vadd.f32 %v1118, %v1119
        %v1121 = vrot.slane %v1120, 4
        %v1122 = vadd.f32 %v1120, %v1121
        %v1123 = vrot.slane %v1122, 2
        %v1124 = vadd.f32 %v1122, %v1123
        %v1125 = vrot.slane %v1124, 1
        %v1126 = vadd.f32 %v1124, %v1125
        %v1127 = vrcp.pop %v1108
        %v1128 = vrcp.pop %v1117
        %v1129 = vrcp.pop %v1126
        %vm1130 = vcmp.eq.f32.partialorder %v1083, 1.0
        %vm1131 = vcmp.eq.f32.partialorder %v1085, 1.0
        %vm1132 = vcmp.eq.f32.partialorder %v1087, 1.0
        %vm1133 = vcmp.eq.f32.partialorder %v1089, 1.0
        %vm1134 = vcmp.eq.f32.partialorder %v1091, 1.0
        %vm1135 = vcmp.eq.f32.partialorder %v1093, 1.0
        %vm1136 = vcmp.eq.f32.partialorder %v1095, 1.0
        %vm1137 = vcmp.eq.f32.partialorder %v1097, 1.0
        %vm1138 = vcmp.eq.f32.partialorder %v1099, 1.0
        %v1139 = vsel %vm1130, 0.0, %v1083
        %v1140 = vsel %vm1131, 0.0, %v1085
        %v1141 = vsel %vm1132, 0.0, %v1087
        %v1142 = vsel %vm1133, 0.0, %v1089
        %v1143 = vsel %vm1134, 0.0, %v1091
        %v1144 = vsel %vm1135, 0.0, %v1093
        %v1145 = vsel %vm1136, 0.0, %v1095
        %v1146 = vsel %vm1137, 0.0, %v1097
        %v1147 = vsel %vm1138, 0.0, %v1099
        %v1148 = vsel %vm326, %v1145, -inf
        %v1149 = vmax.f32 %v1139, %v1148
        %v1150 = vmax.f32 %v1149, %v1142
        %v1151 = vrot.slane %v1150, 4
        %v1152 = vmax.f32 %v1150, %v1151
        %v1153 = vrot.slane %v1152, 2
        %v1154 = vmax.f32 %v1152, %v1153
        %v1155 = vrot.slane %v1154, 1
        %v1156 = vmax.f32 %v1154, %v1155
        %v1157 = vsel %vm326, %v1146, -inf
        %v1158 = vmax.f32 %v1140, %v1157
        %v1159 = vmax.f32 %v1158, %v1143
        %v1160 = vrot.slane %v1159, 4
        %v1161 = vmax.f32 %v1159, %v1160
        %v1162 = vrot.slane %v1161, 2
        %v1163 = vmax.f32 %v1161, %v1162
        %v1164 = vrot.slane %v1163, 1
        %v1165 = vmax.f32 %v1163, %v1164
        %v1166 = vsel %vm326, %v1147, -inf
        %v1167 = vmax.f32 %v1141, %v1166
        %v1168 = vmax.f32 %v1167, %v1144
        %v1169 = vrot.slane %v1168, 4
        %v1170 = vmax.f32 %v1168, %v1169
        %v1171 = vrot.slane %v1170, 2
        %v1172 = vmax.f32 %v1170, %v1171
        %v1173 = vrot.slane %v1172, 1
        %v1174 = vmax.f32 %v1172, %v1173
        %v1175 = vmul.f32 %v1156, %v1127
        %v1176 = vmul.f32 %v1165, %v1128
        %v1177 = vmul.f32 %v1174, %v1129
        %vm1178 = vcmp.eq.f32.partialorder %v1139, %v1156
        %vm1179 = vcmp.eq.f32.partialorder %v1140, %v1165
        %vm1180 = vcmp.eq.f32.partialorder %v1141, %v1174
        %vm1181 = vcmp.eq.f32.partialorder %v1142, %v1156
        %vm1182 = vcmp.eq.f32.partialorder %v1143, %v1165
        %vm1183 = vcmp.eq.f32.partialorder %v1144, %v1174
        %vm1184 = vcmp.eq.f32.partialorder %v1145, %v1156
        %vm1185 = vcmp.eq.f32.partialorder %v1146, %v1165
        %vm1186 = vcmp.eq.f32.partialorder %v1147, %v1174
        %v1187 = vsel %vm1178, 0.0, %v1139
        %v1188 = vsel %vm1179, 0.0, %v1140
        %v1189 = vsel %vm1180, 0.0, %v1141
        %v1190 = vsel %vm1181, 0.0, %v1142
        %v1191 = vsel %vm1182, 0.0, %v1143
        %v1192 = vsel %vm1183, 0.0, %v1144
        %v1193 = vsel %vm1184, 0.0, %v1145
        %v1194 = vsel %vm1185, 0.0, %v1146
        %v1195 = vsel %vm1186, 0.0, %v1147
        %v1196 = vsel %vm326, %v1193, -inf
        %v1197 = vmax.f32 %v1187, %v1196
        %v1198 = vmax.f32 %v1197, %v1190
        %v1199 = vrot.slane %v1198, 4
        %v1200 = vmax.f32 %v1198, %v1199
        %v1201 = vrot.slane %v1200, 2
        %v1202 = vmax.f32 %v1200, %v1201
        %v1203 = vrot.slane %v1202, 1
        %v1204 = vmax.f32 %v1202, %v1203
        %v1205 = vsel %vm326, %v1194, -inf
        %v1206 = vmax.f32 %v1188, %v1205
        %v1207 = vmax.f32 %v1206, %v1191
        %v1208 = vrot.slane %v1207, 4
        %v1209 = vmax.f32 %v1207, %v1208
        %v1210 = vrot.slane %v1209, 2
        %v1211 = vmax.f32 %v1209, %v1210
        %v1212 = vrot.slane %v1211, 1
        %v1213 = vmax.f32 %v1211, %v1212
        %v1214 = vsel %vm326, %v1195, -inf
        %v1215 = vmax.f32 %v1189, %v1214
        %v1216 = vmax.f32 %v1215, %v1192
        %v1217 = vrot.slane %v1216, 4
        %v1218 = vmax.f32 %v1216, %v1217
        %v1219 = vrot.slane %v1218, 2
        %v1220 = vmax.f32 %v1218, %v1219
        %v1221 = vrot.slane %v1220, 1
        %v1222 = vmax.f32 %v1220, %v1221
        %v1223 = vmul.f32 %v1204, %v1127
        %v1224 = vmul.f32 %v1213, %v1128
        %v1225 = vmul.f32 %v1222, %v1129
        %vm1226 = vcmp.eq.f32.partialorder %v1187, %v1204
        %vm1227 = vcmp.eq.f32.partialorder %v1188, %v1213
        %vm1228 = vcmp.eq.f32.partialorder %v1189, %v1222
        %vm1229 = vcmp.eq.f32.partialorder %v1190, %v1204
        %vm1230 = vcmp.eq.f32.partialorder %v1191, %v1213
        %vm1231 = vcmp.eq.f32.partialorder %v1192, %v1222
        %vm1232 = vcmp.eq.f32.partialorder %v1193, %v1204
        %vm1233 = vcmp.eq.f32.partialorder %v1194, %v1213
        %vm1234 = vcmp.eq.f32.partialorder %v1195, %v1222
        %v1235 = vsel %vm1226, 0.0, %v1187
        %v1236 = vsel %vm1227, 0.0, %v1188
        %v1237 = vsel %vm1228, 0.0, %v1189
        %v1238 = vsel %vm1229, 0.0, %v1190
        %v1239 = vsel %vm1230, 0.0, %v1191
        %v1240 = vsel %vm1231, 0.0, %v1192
        %v1241 = vsel %vm1232, 0.0, %v1193
        %v1242 = vsel %vm1233, 0.0, %v1194
        %v1243 = vsel %vm1234, 0.0, %v1195
        %v1244 = vsel %vm326, %v1241, -inf
        %v1245 = vmax.f32 %v1235, %v1244
        %v1246 = vmax.f32 %v1245, %v1238
        %v1247 = vrot.slane %v1246, 4
        %v1248 = vmax.f32 %v1246, %v1247
        %v1249 = vrot.slane %v1248, 2
        %v1250 = vmax.f32 %v1248, %v1249
        %v1251 = vrot.slane %v1250, 1
        %v1252 = vmax.f32 %v1250, %v1251
        %v1253 = vsel %vm326, %v1242, -inf
        %v1254 = vmax.f32 %v1236, %v1253
        %v1255 = vmax.f32 %v1254, %v1239
        %v1256 = vrot.slane %v1255, 4
        %v1257 = vmax.f32 %v1255, %v1256
        %v1258 = vrot.slane %v1257, 2
        %v1259 = vmax.f32 %v1257, %v1258
        %v1260 = vrot.slane %v1259, 1
        %v1261 = vmax.f32 %v1259, %v1260
        %v1262 = vsel %vm326, %v1243, -inf
        %v1263 = vmax.f32 %v1237, %v1262
        %v1264 = vmax.f32 %v1263, %v1240
        %v1265 = vrot.slane %v1264, 4
        %v1266 = vmax.f32 %v1264, %v1265
        %v1267 = vrot.slane %v1266, 2
        %v1268 = vmax.f32 %v1266, %v1267
        %v1269 = vrot.slane %v1268, 1
        %v1270 = vmax.f32 %v1268, %v1269
        %v1271 = vmul.f32 %v1252, %v1127
        %v1272 = vmul.f32 %v1261, %v1128
        %v1273 = vmul.f32 %v1270, %v1129
        %v1277 = vcombine.low %v1127, %v1128
        %v1279 = vunpack.c.l.s4 1966171168
        %v1280 = vunpack.c.0.s8 %v1279
        %v1281 = vlaneseq
        %v1282 = vshrl.u32 %v1281, 7
        %v1283 = vsub.s32 %v1280, %v1282
        %v1284 = vrot.slane %v1277, %v1283
        %v1286 = vunpack.c.l.s4 1966171168
        %v1287 = vunpack.c.0.s8 %v1286
        %v1288 = vlaneseq
        %v1289 = vshrl.u32 %v1288, 7
        %v1290 = vsub.s32 %v1287, %v1289
        %v1291 = vrot.slane %v1129, %v1290
        %v1292 = vcombine.low %v1284, %v1291
        %v1294 = vunpack.c.l.s4 1966171168
        %v1295 = vunpack.c.0.s8 %v1294
        %v1296 = vlaneseq
        %v1297 = vshrl.u32 %v1296, 7
        %v1298 = vsub.s32 %v1295, %v1297
        %v1299 = vrot.slane %v1292, %v1298
        %s1301 = scalar_lea.vmem [#allocation2], 24
        %1302 = vst.msk [vmem:[%s1301] ss:$8 sm:$0x7] %vm585, %v1299
        %1303 = vst.msk [vmem:[%s1301] ss:$8 sm:$0x0] %vm585, %v1299
        %v1307 = vcombine.low %v1175, %v1176
        %v1309 = vunpack.c.l.s4 1966171168
        %v1310 = vunpack.c.0.s8 %v1309
        %v1311 = vlaneseq
        %v1312 = vshrl.u32 %v1311, 7
        %v1313 = vsub.s32 %v1310, %v1312
        %v1314 = vrot.slane %v1307, %v1313
        %v1316 = vunpack.c.l.s4 1966171168
        %v1317 = vunpack.c.0.s8 %v1316
        %v1318 = vlaneseq
        %v1319 = vshrl.u32 %v1318, 7
        %v1320 = vsub.s32 %v1317, %v1319
        %v1321 = vrot.slane %v1177, %v1320
        %v1322 = vcombine.low %v1314, %v1321
        %v1324 = vunpack.c.l.s4 1966171168
        %v1325 = vunpack.c.0.s8 %v1324
        %v1326 = vlaneseq
        %v1327 = vshrl.u32 %v1326, 7
        %v1328 = vsub.s32 %v1325, %v1327
        %v1329 = vrot.slane %v1322, %v1328
        %s1331 = scalar_lea.vmem [#allocation2], 25
        %1332 = vst.msk [vmem:[%s1331] ss:$8 sm:$0x7] %vm585, %v1329
        %1333 = vst.msk [vmem:[%s1331] ss:$8 sm:$0x0] %vm585, %v1329
        %v1337 = vcombine.low %v1223, %v1224
        %v1339 = vunpack.c.l.s4 1966171168
        %v1340 = vunpack.c.0.s8 %v1339
        %v1341 = vlaneseq
        %v1342 = vshrl.u32 %v1341, 7
        %v1343 = vsub.s32 %v1340, %v1342
        %v1344 = vrot.slane %v1337, %v1343
        %v1346 = vunpack.c.l.s4 1966171168
        %v1347 = vunpack.c.0.s8 %v1346
        %v1348 = vlaneseq
        %v1349 = vshrl.u32 %v1348, 7
        %v1350 = vsub.s32 %v1347, %v1349
        %v1351 = vrot.slane %v1225, %v1350
        %v1352 = vcombine.low %v1344, %v1351
        %v1354 = vunpack.c.l.s4 1966171168
        %v1355 = vunpack.c.0.s8 %v1354
        %v1356 = vlaneseq
        %v1357 = vshrl.u32 %v1356, 7
        %v1358 = vsub.s32 %v1355, %v1357
        %v1359 = vrot.slane %v1352, %v1358
        %s1361 = scalar_lea.vmem [#allocation2], 26
        %1362 = vst.msk [vmem:[%s1361] ss:$8 sm:$0x7] %vm585, %v1359
        %1363 = vst.msk [vmem:[%s1361] ss:$8 sm:$0x0] %vm585, %v1359
        %v1367 = vcombine.low %v1271, %v1272
        %v1369 = vunpack.c.l.s4 1966171168
        %v1370 = vunpack.c.0.s8 %v1369
        %v1371 = vlaneseq
        %v1372 = vshrl.u32 %v1371, 7
        %v1373 = vsub.s32 %v1370, %v1372
        %v1374 = vrot.slane %v1367, %v1373
        %v1376 = vunpack.c.l.s4 1966171168
        %v1377 = vunpack.c.0.s8 %v1376
        %v1378 = vlaneseq
        %v1379 = vshrl.u32 %v1378, 7
        %v1380 = vsub.s32 %v1377, %v1379
        %v1381 = vrot.slane %v1273, %v1380
        %v1382 = vcombine.low %v1374, %v1381
        %v1384 = vunpack.c.l.s4 1966171168
        %v1385 = vunpack.c.0.s8 %v1384
        %v1386 = vlaneseq
        %v1387 = vshrl.u32 %v1386, 7
        %v1388 = vsub.s32 %v1385, %v1387
        %v1389 = vrot.slane %v1382, %v1388
        %s1391 = scalar_lea.vmem [#allocation2], 27
        %1392 = vst.msk [vmem:[%s1391] ss:$8 sm:$0x7] %vm585, %v1389
        %1393 = vst.msk [vmem:[%s1391] ss:$8 sm:$0x0] %vm585, %v1389
        %s1394 = scalar_lea.vmem %s287, 216 [#allocation4]
        %v1395 = vld [vmem:[%s1394] sm:$0xff]
        %v1396 = vld [vmem:[%s1394 + $0x8] sm:$0xff]
        %v1397 = vld [vmem:[%s1394 + $0x10] sm:$0xff]
        %v1398 = vld [vmem:[%s1394 + $0x18] sm:$0xff]
        %v1399 = vld [vmem:[%s1394 + $0x20] sm:$0xff]
        %v1400 = vld [vmem:[%s1394 + $0x28] sm:$0xff]
        %v1401 = vld [vmem:[%s1394 + $0x30] sm:$0x1]
        %v1402 = vld [vmem:[%s1394 + $0x38] sm:$0x1]
        %v1403 = vld [vmem:[%s1394 + $0x40] sm:$0x1]
        %v1404 = vsel %vm326, %v1401, -inf
        %v1405 = vmax.f32 %v1395, %v1404
        %v1406 = vmax.f32 %v1405, %v1398
        %v1407 = vrot.slane %v1406, 4
        %v1408 = vmax.f32 %v1406, %v1407
        %v1409 = vrot.slane %v1408, 2
        %v1410 = vmax.f32 %v1408, %v1409
        %v1411 = vrot.slane %v1410, 1
        %v1412 = vmax.f32 %v1410, %v1411
        %v1413 = vsel %vm326, %v1402, -inf
        %v1414 = vmax.f32 %v1396, %v1413
        %v1415 = vmax.f32 %v1414, %v1399
        %v1416 = vrot.slane %v1415, 4
        %v1417 = vmax.f32 %v1415, %v1416
        %v1418 = vrot.slane %v1417, 2
        %v1419 = vmax.f32 %v1417, %v1418
        %v1420 = vrot.slane %v1419, 1
        %v1421 = vmax.f32 %v1419, %v1420
        %v1422 = vsel %vm326, %v1403, -inf
        %v1423 = vmax.f32 %v1397, %v1422
        %v1424 = vmax.f32 %v1423, %v1400
        %v1425 = vrot.slane %v1424, 4
        %v1426 = vmax.f32 %v1424, %v1425
        %v1427 = vrot.slane %v1426, 2
        %v1428 = vmax.f32 %v1426, %v1427
        %v1429 = vrot.slane %v1428, 1
        %v1430 = vmax.f32 %v1428, %v1429
        %v1431 = vsub.f32 %v1395, %v1412
        %v1432 = vsub.f32 %v1396, %v1421
        %v1433 = vsub.f32 %v1397, %v1430
        %v1434 = vsub.f32 %v1398, %v1412
        %v1435 = vsub.f32 %v1399, %v1421
        %v1436 = vsub.f32 %v1400, %v1430
        %v1437 = vsub.f32 %v1401, %v1412
        %v1438 = vsub.f32 %v1402, %v1421
        %v1439 = vsub.f32 %v1403, %v1430
        %v1440 = vmul.f32 %v1431, 1.442695
        %v1441 = vpow.pop %v1440
        %v1442 = vmul.f32 %v1432, 1.442695
        %v1443 = vpow.pop %v1442
        %v1444 = vmul.f32 %v1433, 1.442695
        %v1445 = vpow.pop %v1444
        %v1446 = vmul.f32 %v1434, 1.442695
        %v1447 = vpow.pop %v1446
        %v1448 = vmul.f32 %v1435, 1.442695
        %v1449 = vpow.pop %v1448
        %v1450 = vmul.f32 %v1436, 1.442695
        %v1451 = vpow.pop %v1450
        %v1452 = vmul.f32 %v1437, 1.442695
        %v1453 = vpow.pop %v1452
        %v1454 = vmul.f32 %v1438, 1.442695
        %v1455 = vpow.pop %v1454
        %v1456 = vmul.f32 %v1439, 1.442695
        %v1457 = vpow.pop %v1456
        %v1458 = vadd.f32 %v1441, %v1447
        %v1459 = vsel %vm326, %v1453, 0.0
        %v1460 = vadd.f32 %v1458, %v1459
        %v1461 = vrot.slane %v1460, 4
        %v1462 = vadd.f32 %v1460, %v1461
        %v1463 = vrot.slane %v1462, 2
        %v1464 = vadd.f32 %v1462, %v1463
        %v1465 = vrot.slane %v1464, 1
        %v1466 = vadd.f32 %v1464, %v1465
        %v1467 = vadd.f32 %v1443, %v1449
        %v1468 = vsel %vm326, %v1455, 0.0
        %v1469 = vadd.f32 %v1467, %v1468
        %v1470 = vrot.slane %v1469, 4
        %v1471 = vadd.f32 %v1469, %v1470
        %v1472 = vrot.slane %v1471, 2
        %v1473 = vadd.f32 %v1471, %v1472
        %v1474 = vrot.slane %v1473, 1
        %v1475 = vadd.f32 %v1473, %v1474
        %v1476 = vadd.f32 %v1445, %v1451
        %v1477 = vsel %vm326, %v1457, 0.0
        %v1478 = vadd.f32 %v1476, %v1477
        %v1479 = vrot.slane %v1478, 4
        %v1480 = vadd.f32 %v1478, %v1479
        %v1481 = vrot.slane %v1480, 2
        %v1482 = vadd.f32 %v1480, %v1481
        %v1483 = vrot.slane %v1482, 1
        %v1484 = vadd.f32 %v1482, %v1483
        %v1485 = vrcp.pop %v1466
        %v1486 = vrcp.pop %v1475
        %v1487 = vrcp.pop %v1484
        %vm1488 = vcmp.eq.f32.partialorder %v1441, 1.0
        %vm1489 = vcmp.eq.f32.partialorder %v1443, 1.0
        %vm1490 = vcmp.eq.f32.partialorder %v1445, 1.0
        %vm1491 = vcmp.eq.f32.partialorder %v1447, 1.0
        %vm1492 = vcmp.eq.f32.partialorder %v1449, 1.0
        %vm1493 = vcmp.eq.f32.partialorder %v1451, 1.0
        %vm1494 = vcmp.eq.f32.partialorder %v1453, 1.0
        %vm1495 = vcmp.eq.f32.partialorder %v1455, 1.0
        %vm1496 = vcmp.eq.f32.partialorder %v1457, 1.0
        %v1497 = vsel %vm1488, 0.0, %v1441
        %v1498 = vsel %vm1489, 0.0, %v1443
        %v1499 = vsel %vm1490, 0.0, %v1445
        %v1500 = vsel %vm1491, 0.0, %v1447
        %v1501 = vsel %vm1492, 0.0, %v1449
        %v1502 = vsel %vm1493, 0.0, %v1451
        %v1503 = vsel %vm1494, 0.0, %v1453
        %v1504 = vsel %vm1495, 0.0, %v1455
        %v1505 = vsel %vm1496, 0.0, %v1457
        %v1506 = vsel %vm326, %v1503, -inf
        %v1507 = vmax.f32 %v1497, %v1506
        %v1508 = vmax.f32 %v1507, %v1500
        %v1509 = vrot.slane %v1508, 4
        %v1510 = vmax.f32 %v1508, %v1509
        %v1511 = vrot.slane %v1510, 2
        %v1512 = vmax.f32 %v1510, %v1511
        %v1513 = vrot.slane %v1512, 1
        %v1514 = vmax.f32 %v1512, %v1513
        %v1515 = vsel %vm326, %v1504, -inf
        %v1516 = vmax.f32 %v1498, %v1515
        %v1517 = vmax.f32 %v1516, %v1501
        %v1518 = vrot.slane %v1517, 4
        %v1519 = vmax.f32 %v1517, %v1518
        %v1520 = vrot.slane %v1519, 2
        %v1521 = vmax.f32 %v1519, %v1520
        %v1522 = vrot.slane %v1521, 1
        %v1523 = vmax.f32 %v1521, %v1522
        %v1524 = vsel %vm326, %v1505, -inf
        %v1525 = vmax.f32 %v1499, %v1524
        %v1526 = vmax.f32 %v1525, %v1502
        %v1527 = vrot.slane %v1526, 4
        %v1528 = vmax.f32 %v1526, %v1527
        %v1529 = vrot.slane %v1528, 2
        %v1530 = vmax.f32 %v1528, %v1529
        %v1531 = vrot.slane %v1530, 1
        %v1532 = vmax.f32 %v1530, %v1531
        %v1533 = vmul.f32 %v1514, %v1485
        %v1534 = vmul.f32 %v1523, %v1486
        %v1535 = vmul.f32 %v1532, %v1487
        %vm1536 = vcmp.eq.f32.partialorder %v1497, %v1514
        %vm1537 = vcmp.eq.f32.partialorder %v1498, %v1523
        %vm1538 = vcmp.eq.f32.partialorder %v1499, %v1532
        %vm1539 = vcmp.eq.f32.partialorder %v1500, %v1514
        %vm1540 = vcmp.eq.f32.partialorder %v1501, %v1523
        %vm1541 = vcmp.eq.f32.partialorder %v1502, %v1532
        %vm1542 = vcmp.eq.f32.partialorder %v1503, %v1514
        %vm1543 = vcmp.eq.f32.partialorder %v1504, %v1523
        %vm1544 = vcmp.eq.f32.partialorder %v1505, %v1532
        %v1545 = vsel %vm1536, 0.0, %v1497
        %v1546 = vsel %vm1537, 0.0, %v1498
        %v1547 = vsel %vm1538, 0.0, %v1499
        %v1548 = vsel %vm1539, 0.0, %v1500
        %v1549 = vsel %vm1540, 0.0, %v1501
        %v1550 = vsel %vm1541, 0.0, %v1502
        %v1551 = vsel %vm1542, 0.0, %v1503
        %v1552 = vsel %vm1543, 0.0, %v1504
        %v1553 = vsel %vm1544, 0.0, %v1505
        %v1554 = vsel %vm326, %v1551, -inf
        %v1555 = vmax.f32 %v1545, %v1554
        %v1556 = vmax.f32 %v1555, %v1548
        %v1557 = vrot.slane %v1556, 4
        %v1558 = vmax.f32 %v1556, %v1557
        %v1559 = vrot.slane %v1558, 2
        %v1560 = vmax.f32 %v1558, %v1559
        %v1561 = vrot.slane %v1560, 1
        %v1562 = vmax.f32 %v1560, %v1561
        %v1563 = vsel %vm326, %v1552, -inf
        %v1564 = vmax.f32 %v1546, %v1563
        %v1565 = vmax.f32 %v1564, %v1549
        %v1566 = vrot.slane %v1565, 4
        %v1567 = vmax.f32 %v1565, %v1566
        %v1568 = vrot.slane %v1567, 2
        %v1569 = vmax.f32 %v1567, %v1568
        %v1570 = vrot.slane %v1569, 1
        %v1571 = vmax.f32 %v1569, %v1570
        %v1572 = vsel %vm326, %v1553, -inf
        %v1573 = vmax.f32 %v1547, %v1572
        %v1574 = vmax.f32 %v1573, %v1550
        %v1575 = vrot.slane %v1574, 4
        %v1576 = vmax.f32 %v1574, %v1575
        %v1577 = vrot.slane %v1576, 2
        %v1578 = vmax.f32 %v1576, %v1577
        %v1579 = vrot.slane %v1578, 1
        %v1580 = vmax.f32 %v1578, %v1579
        %v1581 = vmul.f32 %v1562, %v1485
        %v1582 = vmul.f32 %v1571, %v1486
        %v1583 = vmul.f32 %v1580, %v1487
        %vm1584 = vcmp.eq.f32.partialorder %v1545, %v1562
        %vm1585 = vcmp.eq.f32.partialorder %v1546, %v1571
        %vm1586 = vcmp.eq.f32.partialorder %v1547, %v1580
        %vm1587 = vcmp.eq.f32.partialorder %v1548, %v1562
        %vm1588 = vcmp.eq.f32.partialorder %v1549, %v1571
        %vm1589 = vcmp.eq.f32.partialorder %v1550, %v1580
        %vm1590 = vcmp.eq.f32.partialorder %v1551, %v1562
        %vm1591 = vcmp.eq.f32.partialorder %v1552, %v1571
        %vm1592 = vcmp.eq.f32.partialorder %v1553, %v1580
        %v1593 = vsel %vm1584, 0.0, %v1545
        %v1594 = vsel %vm1585, 0.0, %v1546
        %v1595 = vsel %vm1586, 0.0, %v1547
        %v1596 = vsel %vm1587, 0.0, %v1548
        %v1597 = vsel %vm1588, 0.0, %v1549
        %v1598 = vsel %vm1589, 0.0, %v1550
        %v1599 = vsel %vm1590, 0.0, %v1551
        %v1600 = vsel %vm1591, 0.0, %v1552
        %v1601 = vsel %vm1592, 0.0, %v1553
        %v1602 = vsel %vm326, %v1599, -inf
        %v1603 = vmax.f32 %v1593, %v1602
        %v1604 = vmax.f32 %v1603, %v1596
        %v1605 = vrot.slane %v1604, 4
        %v1606 = vmax.f32 %v1604, %v1605
        %v1607 = vrot.slane %v1606, 2
        %v1608 = vmax.f32 %v1606, %v1607
        %v1609 = vrot.slane %v1608, 1
        %v1610 = vmax.f32 %v1608, %v1609
        %v1611 = vsel %vm326, %v1600, -inf
        %v1612 = vmax.f32 %v1594, %v1611
        %v1613 = vmax.f32 %v1612, %v1597
        %v1614 = vrot.slane %v1613, 4
        %v1615 = vmax.f32 %v1613, %v1614
        %v1616 = vrot.slane %v1615, 2
        %v1617 = vmax.f32 %v1615, %v1616
        %v1618 = vrot.slane %v1617, 1
        %v1619 = vmax.f32 %v1617, %v1618
        %v1620 = vsel %vm326, %v1601, -inf
        %v1621 = vmax.f32 %v1595, %v1620
        %v1622 = vmax.f32 %v1621, %v1598
        %v1623 = vrot.slane %v1622, 4
        %v1624 = vmax.f32 %v1622, %v1623
        %v1625 = vrot.slane %v1624, 2
        %v1626 = vmax.f32 %v1624, %v1625
        %v1627 = vrot.slane %v1626, 1
        %v1628 = vmax.f32 %v1626, %v1627
        %v1629 = vmul.f32 %v1610, %v1485
        %v1630 = vmul.f32 %v1619, %v1486
        %v1631 = vmul.f32 %v1628, %v1487
        %v1635 = vcombine.low %v1485, %v1486
        %v1637 = vunpack.c.l.s4 1966171168
        %v1638 = vunpack.c.0.s8 %v1637
        %v1639 = vlaneseq
        %v1640 = vshrl.u32 %v1639, 7
        %v1641 = vsub.s32 %v1638, %v1640
        %v1642 = vrot.slane %v1635, %v1641
        %v1644 = vunpack.c.l.s4 1966171168
        %v1645 = vunpack.c.0.s8 %v1644
        %v1646 = vlaneseq
        %v1647 = vshrl.u32 %v1646, 7
        %v1648 = vsub.s32 %v1645, %v1647
        %v1649 = vrot.slane %v1487, %v1648
        %v1650 = vcombine.low %v1642, %v1649
        %v1652 = vunpack.c.l.s4 1966171168
        %v1653 = vunpack.c.0.s8 %v1652
        %v1654 = vlaneseq
        %v1655 = vshrl.u32 %v1654, 7
        %v1656 = vsub.s32 %v1653, %v1655
        %v1657 = vrot.slane %v1650, %v1656
        %s1659 = scalar_lea.vmem [#allocation2], 28
        %1660 = vst.msk [vmem:[%s1659] ss:$8 sm:$0x7] %vm585, %v1657
        %1661 = vst.msk [vmem:[%s1659] ss:$8 sm:$0x0] %vm585, %v1657
        %v1665 = vcombine.low %v1533, %v1534
        %v1667 = vunpack.c.l.s4 1966171168
        %v1668 = vunpack.c.0.s8 %v1667
        %v1669 = vlaneseq
        %v1670 = vshrl.u32 %v1669, 7
        %v1671 = vsub.s32 %v1668, %v1670
        %v1672 = vrot.slane %v1665, %v1671
        %v1674 = vunpack.c.l.s4 1966171168
        %v1675 = vunpack.c.0.s8 %v1674
        %v1676 = vlaneseq
        %v1677 = vshrl.u32 %v1676, 7
        %v1678 = vsub.s32 %v1675, %v1677
        %v1679 = vrot.slane %v1535, %v1678
        %v1680 = vcombine.low %v1672, %v1679
        %v1682 = vunpack.c.l.s4 1966171168
        %v1683 = vunpack.c.0.s8 %v1682
        %v1684 = vlaneseq
        %v1685 = vshrl.u32 %v1684, 7
        %v1686 = vsub.s32 %v1683, %v1685
        %v1687 = vrot.slane %v1680, %v1686
        %s1689 = scalar_lea.vmem [#allocation2], 29
        %1690 = vst.msk [vmem:[%s1689] ss:$8 sm:$0x7] %vm585, %v1687
        %1691 = vst.msk [vmem:[%s1689] ss:$8 sm:$0x0] %vm585, %v1687
        %v1695 = vcombine.low %v1581, %v1582
        %v1697 = vunpack.c.l.s4 1966171168
        %v1698 = vunpack.c.0.s8 %v1697
        %v1699 = vlaneseq
        %v1700 = vshrl.u32 %v1699, 7
        %v1701 = vsub.s32 %v1698, %v1700
        %v1702 = vrot.slane %v1695, %v1701
        %v1704 = vunpack.c.l.s4 1966171168
        %v1705 = vunpack.c.0.s8 %v1704
        %v1706 = vlaneseq
        %v1707 = vshrl.u32 %v1706, 7
        %v1708 = vsub.s32 %v1705, %v1707
        %v1709 = vrot.slane %v1583, %v1708
        %v1710 = vcombine.low %v1702, %v1709
        %v1712 = vunpack.c.l.s4 1966171168
        %v1713 = vunpack.c.0.s8 %v1712
        %v1714 = vlaneseq
        %v1715 = vshrl.u32 %v1714, 7
        %v1716 = vsub.s32 %v1713, %v1715
        %v1717 = vrot.slane %v1710, %v1716
        %s1719 = scalar_lea.vmem [#allocation2], 30
        %1720 = vst.msk [vmem:[%s1719] ss:$8 sm:$0x7] %vm585, %v1717
        %1721 = vst.msk [vmem:[%s1719] ss:$8 sm:$0x0] %vm585, %v1717
        %v1725 = vcombine.low %v1629, %v1630
        %v1727 = vunpack.c.l.s4 1966171168
        %v1728 = vunpack.c.0.s8 %v1727
        %v1729 = vlaneseq
        %v1730 = vshrl.u32 %v1729, 7
        %v1731 = vsub.s32 %v1728, %v1730
        %v1732 = vrot.slane %v1725, %v1731
        %v1734 = vunpack.c.l.s4 1966171168
        %v1735 = vunpack.c.0.s8 %v1734
        %v1736 = vlaneseq
        %v1737 = vshrl.u32 %v1736, 7
        %v1738 = vsub.s32 %v1735, %v1737
        %v1739 = vrot.slane %v1631, %v1738
        %v1740 = vcombine.low %v1732, %v1739
        %v1742 = vunpack.c.l.s4 1966171168
        %v1743 = vunpack.c.0.s8 %v1742
        %v1744 = vlaneseq
        %v1745 = vshrl.u32 %v1744, 7
        %v1746 = vsub.s32 %v1743, %v1745
        %v1747 = vrot.slane %v1740, %v1746
        %s1749 = scalar_lea.vmem [#allocation2], 31
        %1750 = vst.msk [vmem:[%s1749] ss:$8 sm:$0x7] %vm585, %v1747
        %1751 = vst.msk [vmem:[%s1749] ss:$8 sm:$0x0] %vm585, %v1747
        %v1752 = vld [vmem:[#allocation2] sm:$0xff]
        %v1753 = vld [vmem:[#allocation2 + $0x8] sm:$0xff]
        %v1754 = vld [vmem:[#allocation2 + $0x10] sm:$0xff]
        %v1755 = vld [vmem:[#allocation2 + $0x18] sm:$0xff]
        %v1756 = vld [vmem:[#allocation2 + $0x20] sm:$0xff]
        %v1757 = vld [vmem:[#allocation2 + $0x28] sm:$0xff]
        %v1758 = vld [vmem:[%s1] sm:$0xff]
        %v1759 = vld [vmem:[%s1 + $0x8] sm:$0xff]
        %v1760 = vld [vmem:[%s1 + $0x10] sm:$0xff]
        %v1761 = vld [vmem:[%s1 + $0x18] sm:$0xff]
        %v1762 = vld [vmem:[%s1 + $0x20] sm:$0xff]
        %v1763 = vld [vmem:[%s1 + $0x28] sm:$0xff]
        %v1764 = vld [vmem:[%s1 + $0x30] sm:$0xff]
        %v1765 = vld [vmem:[%s1 + $0x38] sm:$0xff]
        %v1766 = vld [vmem:[%s2] sm:$0xff]
        %v1767 = vld [vmem:[%s2 + $0x8] sm:$0xff]
        %v1768 = vld [vmem:[%s2 + $0x10] sm:$0xff]
        %v1769 = vld [vmem:[%s2 + $0x18] sm:$0xff]
        %v1770 = vld [vmem:[%s2 + $0x20] sm:$0xff]
        %v1771 = vld [vmem:[%s2 + $0x28] sm:$0xff]
        %v1772 = vld [vmem:[%s2 + $0x30] sm:$0xff]
        %v1773 = vld [vmem:[%s2 + $0x38] sm:$0xff]
        %1775 = vset.pattern.permute.xlu0 0
        %1776 = vperm.xlu0 %1775, %v1766
        %v1777 = vpop.permute.xlu0 %1776
        %1780 = vset.pattern.permute.xlu0 0
        %1781 = vperm.xlu0 %1780, %v1767
        %v1782 = vpop.permute.xlu0 %1781
        %1785 = vset.pattern.permute.xlu0 0
        %1786 = vperm.xlu0 %1785, %v1768
        %v1787 = vpop.permute.xlu0 %1786
        %1790 = vset.pattern.permute.xlu0 0
        %1791 = vperm.xlu0 %1790, %v1769
        %v1792 = vpop.permute.xlu0 %1791
        %1795 = vset.pattern.permute.xlu0 0
        %1796 = vperm.xlu0 %1795, %v1770
        %v1797 = vpop.permute.xlu0 %1796
        %1800 = vset.pattern.permute.xlu0 0
        %1801 = vperm.xlu0 %1800, %v1771
        %v1802 = vpop.permute.xlu0 %1801
        %1805 = vset.pattern.permute.xlu0 0
        %1806 = vperm.xlu0 %1805, %v1772
        %v1807 = vpop.permute.xlu0 %1806
        %1810 = vset.pattern.permute.xlu0 0
        %1811 = vperm.xlu0 %1810, %v1773
        %v1812 = vpop.permute.xlu0 %1811
        %vm1814 = vcmask 130048
        %v1816 = vsel %vm1814, %v1758, 0
        %v1819 = vsel %vm1814, %v1759, 0
        %v1822 = vsel %vm1814, %v1760, 0
        %v1825 = vsel %vm1814, %v1761, 0
        %v1828 = vsel %vm1814, %v1762, 0
        %v1831 = vsel %vm1814, %v1763, 0
        %v1834 = vsel %vm1814, %v1764, 0
        %v1837 = vsel %vm1814, %v1765, 0
        %1839 = vmatprep.subr.mxu0 0.0
        %1840 = vmatpush1.msra.mxu0 0.0
        %1841 = vmatprep.subr.mxu0 0.0
        %1842 = vmatpush1.msra.mxu0 0.0
        %1843 = vmatprep.subr.mxu0 0.0
        %1844 = vmatpush1.msra.mxu0 0.0
        %1845 = vmatprep.subr.mxu0 0.0
        %1846 = vmatpush1.msra.mxu0 0.0
        %1847 = vmatprep.subr.mxu0 0.0
        %1848 = vmatpush1.msra.mxu0 0.0
        %1849 = vmatprep.subr.mxu0 0.0
        %1850 = vmatpush1.msra.mxu0 0.0
        %1851 = vmatprep.subr.mxu0 0.0
        %1852 = vmatpush1.msra.mxu0 0.0
        %1853 = vmatprep.subr.mxu0 0.0
        %1854 = vmatpush1.msra.mxu0 0.0
        %1855 = vmatprep.subr.mxu0 0.0
        %1856 = vmatpush1.msra.mxu0 0.0
        %1857 = vmatprep.subr.mxu0 0.0
        %1858 = vmatpush1.msra.mxu0 0.0
        %1859 = vmatprep.subr.mxu0 0.0
        %1860 = vmatpush1.msra.mxu0 0.0
        %1861 = vmatprep.subr.mxu0 0.0
        %1862 = vmatpush1.msra.mxu0 0.0
        %1863 = vmatprep.subr.mxu0 0.0
        %1864 = vmatpush1.msra.mxu0 0.0
        %1865 = vmatprep.subr.mxu0 0.0
        %1866 = vmatpush1.msra.mxu0 0.0
        %1867 = vmatprep.subr.mxu0 %v1756
        %1868 = vmatpush1.msra.mxu0 %v1755
        %1869 = vmatprep.subr.mxu0 %v1753
        %1870 = vmatpush1.msra.mxu0 %v1752
        %1871 = vmatprep.subr.mxu0 0.0
        %1872 = vmatpush2.msra.mxu0 0.0
        %1873 = vmatprep.subr.mxu0 0.0
        %1874 = vmatpush2.msra.mxu0 0.0
        %1875 = vmatprep.subr.mxu0 0.0
        %1876 = vmatpush2.msra.mxu0 0.0
        %1877 = vmatprep.subr.mxu0 0.0
        %1878 = vmatpush2.msra.mxu0 0.0
        %1879 = vmatprep.subr.mxu0 0.0
        %1880 = vmatpush2.msra.mxu0 0.0
        %1881 = vmatprep.subr.mxu0 0.0
        %1882 = vmatpush2.msra.mxu0 0.0
        %1883 = vmatprep.subr.mxu0 0.0
        %1884 = vmatpush2.msra.mxu0 0.0
        %1885 = vmatprep.subr.mxu0 0.0
        %1886 = vmatpush2.msra.mxu0 0.0
        %1887 = vmatprep.subr.mxu0 0.0
        %1888 = vmatpush2.msra.mxu0 0.0
        %1889 = vmatprep.subr.mxu0 0.0
        %1890 = vmatpush2.msra.mxu0 0.0
        %1891 = vmatprep.subr.mxu0 0.0
        %1892 = vmatpush2.msra.mxu0 0.0
        %1893 = vmatprep.subr.mxu0 0.0
        %1894 = vmatpush2.msra.mxu0 0.0
        %1895 = vmatprep.subr.mxu0 0.0
        %1896 = vmatpush2.msra.mxu0 0.0
        %1897 = vmatprep.subr.mxu0 0.0
        %1898 = vmatpush2.msra.mxu0 0.0
        %1899 = vmatprep.subr.mxu0 0.0
        %1900 = vmatpush2.msra.mxu0 0.0
        %1901 = vmatprep.subr.mxu0 0.0
        %1902 = vmatpush2.msra.mxu0 0.0
        %1903 = vmatprep.mubr.f32.mxu0 0.0
        %1904 = vmatmul.mubr.f32.gmra.mxu0 %v1816
        %v1905 = vpop.f32.mrf.mxu0
        %v1906 = vadd.f32 %v1777, %v1905
        %v1907 = vpop.f32.mrf.mxu0
        %v1908 = vadd.f32 %v1777, %v1907
        %1909 = vmatprep.mubr.f32.mxu0 0.0
        %1910 = vmatmul.mubr.f32.gmra.mxu0 %v1819
        %v1911 = vpop.f32.mrf.mxu0
        %v1912 = vadd.f32 %v1782, %v1911
        %v1913 = vpop.f32.mrf.mxu0
        %v1914 = vadd.f32 %v1782, %v1913
        %1915 = vmatprep.mubr.f32.mxu0 0.0
        %1916 = vmatmul.mubr.f32.gmra.mxu0 %v1822
        %v1917 = vpop.f32.mrf.mxu0
        %v1918 = vadd.f32 %v1787, %v1917
        %v1919 = vpop.f32.mrf.mxu0
        %v1920 = vadd.f32 %v1787, %v1919
        %1921 = vmatprep.mubr.f32.mxu0 0.0
        %1922 = vmatmul.mubr.f32.gmra.mxu0 %v1825
        %v1923 = vpop.f32.mrf.mxu0
        %v1924 = vadd.f32 %v1792, %v1923
        %v1925 = vpop.f32.mrf.mxu0
        %v1926 = vadd.f32 %v1792, %v1925
        %1927 = vmatprep.mubr.f32.mxu0 0.0
        %1928 = vmatmul.mubr.f32.gmra.mxu0 %v1828
        %v1929 = vpop.f32.mrf.mxu0
        %v1930 = vadd.f32 %v1797, %v1929
        %v1931 = vpop.f32.mrf.mxu0
        %v1932 = vadd.f32 %v1797, %v1931
        %1933 = vmatprep.mubr.f32.mxu0 0.0
        %1934 = vmatmul.mubr.f32.gmra.mxu0 %v1831
        %v1935 = vpop.f32.mrf.mxu0
        %v1936 = vadd.f32 %v1802, %v1935
        %v1937 = vpop.f32.mrf.mxu0
        %v1938 = vadd.f32 %v1802, %v1937
        %1939 = vmatprep.mubr.f32.mxu0 0.0
        %1940 = vmatmul.mubr.f32.gmra.mxu0 %v1834
        %v1941 = vpop.f32.mrf.mxu0
        %v1942 = vadd.f32 %v1807, %v1941
        %v1943 = vpop.f32.mrf.mxu0
        %v1944 = vadd.f32 %v1807, %v1943
        %1945 = vmatprep.mubr.f32.mxu0 0.0
        %1946 = vmatmul.mubr.f32.gmra.mxu0 %v1837
        %v1947 = vpop.f32.mrf.mxu0
        %v1948 = vadd.f32 %v1812, %v1947
        %v1949 = vpop.f32.mrf.mxu0
        %v1950 = vadd.f32 %v1812, %v1949
        %1951 = vdwg.mxu0
        %1952 = vmatprep.subr.mxu0 0.0
        %1953 = vmatpush1.msra.mxu0 0.0
        %1954 = vmatprep.subr.mxu0 0.0
        %1955 = vmatpush1.msra.mxu0 0.0
        %1956 = vmatprep.subr.mxu0 0.0
        %1957 = vmatpush1.msra.mxu0 0.0
        %1958 = vmatprep.subr.mxu0 0.0
        %1959 = vmatpush1.msra.mxu0 0.0
        %1960 = vmatprep.subr.mxu0 0.0
        %1961 = vmatpush1.msra.mxu0 0.0
        %1962 = vmatprep.subr.mxu0 0.0
        %1963 = vmatpush1.msra.mxu0 0.0
        %1964 = vmatprep.subr.mxu0 0.0
        %1965 = vmatpush1.msra.mxu0 0.0
        %1966 = vmatprep.subr.mxu0 0.0
        %1967 = vmatpush1.msra.mxu0 0.0
        %1968 = vmatprep.subr.mxu0 0.0
        %1969 = vmatpush1.msra.mxu0 0.0
        %1970 = vmatprep.subr.mxu0 0.0
        %1971 = vmatpush1.msra.mxu0 0.0
        %1972 = vmatprep.subr.mxu0 0.0
        %1973 = vmatpush1.msra.mxu0 0.0
        %1974 = vmatprep.subr.mxu0 0.0
        %1975 = vmatpush1.msra.mxu0 0.0
        %1976 = vmatprep.subr.mxu0 0.0
        %1977 = vmatpush1.msra.mxu0 0.0
        %1978 = vmatprep.subr.mxu0 0.0
        %1979 = vmatpush1.msra.mxu0 0.0
        %1980 = vmatprep.subr.mxu0 0.0
        %1981 = vmatpush1.msra.mxu0 %v1757
        %1982 = vmatprep.subr.mxu0 0.0
        %1983 = vmatpush1.msra.mxu0 %v1754
        %1984 = vmatprep.subr.mxu0 0.0
        %1985 = vmatpush2.msra.mxu0 0.0
        %1986 = vmatprep.subr.mxu0 0.0
        %1987 = vmatpush2.msra.mxu0 0.0
        %1988 = vmatprep.subr.mxu0 0.0
        %1989 = vmatpush2.msra.mxu0 0.0
        %1990 = vmatprep.subr.mxu0 0.0
        %1991 = vmatpush2.msra.mxu0 0.0
        %1992 = vmatprep.subr.mxu0 0.0
        %1993 = vmatpush2.msra.mxu0 0.0
        %1994 = vmatprep.subr.mxu0 0.0
        %1995 = vmatpush2.msra.mxu0 0.0
        %1996 = vmatprep.subr.mxu0 0.0
        %1997 = vmatpush2.msra.mxu0 0.0
        %1998 = vmatprep.subr.mxu0 0.0
        %1999 = vmatpush2.msra.mxu0 0.0
        %2000 = vmatprep.subr.mxu0 0.0
        %2001 = vmatpush2.msra.mxu0 0.0
        %2002 = vmatprep.subr.mxu0 0.0
        %2003 = vmatpush2.msra.mxu0 0.0
        %2004 = vmatprep.subr.mxu0 0.0
        %2005 = vmatpush2.msra.mxu0 0.0
        %2006 = vmatprep.subr.mxu0 0.0
        %2007 = vmatpush2.msra.mxu0 0.0
        %2008 = vmatprep.subr.mxu0 0.0
        %2009 = vmatpush2.msra.mxu0 0.0
        %2010 = vmatprep.subr.mxu0 0.0
        %2011 = vmatpush2.msra.mxu0 0.0
        %2012 = vmatprep.subr.mxu0 0.0
        %2013 = vmatpush2.msra.mxu0 0.0
        %2014 = vmatprep.subr.mxu0 0.0
        %2015 = vmatpush2.msra.mxu0 0.0
        %2016 = vmatprep.mubr.f32.mxu0 0.0
        %2017 = vmatmul.mubr.f32.gmra.mxu0 %v1816
        %v2018 = vpop.f32.mrf.mxu0
        %v2019 = vadd.f32 %v1777, %v2018
        %v2020 = vpop.f32.mrf.mxu0
        %2021 = vmatprep.mubr.f32.mxu0 0.0
        %2022 = vmatmul.mubr.f32.gmra.mxu0 %v1819
        %v2023 = vpop.f32.mrf.mxu0
        %v2024 = vadd.f32 %v1782, %v2023
        %v2025 = vpop.f32.mrf.mxu0
        %2026 = vmatprep.mubr.f32.mxu0 0.0
        %2027 = vmatmul.mubr.f32.gmra.mxu0 %v1822
        %v2028 = vpop.f32.mrf.mxu0
        %v2029 = vadd.f32 %v1787, %v2028
        %v2030 = vpop.f32.mrf.mxu0
        %2031 = vmatprep.mubr.f32.mxu0 0.0
        %2032 = vmatmul.mubr.f32.gmra.mxu0 %v1825
        %v2033 = vpop.f32.mrf.mxu0
        %v2034 = vadd.f32 %v1792, %v2033
        %v2035 = vpop.f32.mrf.mxu0
        %2036 = vmatprep.mubr.f32.mxu0 0.0
        %2037 = vmatmul.mubr.f32.gmra.mxu0 %v1828
        %v2038 = vpop.f32.mrf.mxu0
        %v2039 = vadd.f32 %v1797, %v2038
        %v2040 = vpop.f32.mrf.mxu0
        %2041 = vmatprep.mubr.f32.mxu0 0.0
        %2042 = vmatmul.mubr.f32.gmra.mxu0 %v1831
        %v2043 = vpop.f32.mrf.mxu0
        %v2044 = vadd.f32 %v1802, %v2043
        %v2045 = vpop.f32.mrf.mxu0
        %2046 = vmatprep.mubr.f32.mxu0 0.0
        %2047 = vmatmul.mubr.f32.gmra.mxu0 %v1834
        %v2048 = vpop.f32.mrf.mxu0
        %v2049 = vadd.f32 %v1807, %v2048
        %v2050 = vpop.f32.mrf.mxu0
        %2051 = vmatprep.mubr.f32.mxu0 0.0
        %2052 = vmatmul.mubr.f32.gmra.mxu0 %v1837
        %v2053 = vpop.f32.mrf.mxu0
        %v2054 = vadd.f32 %v1812, %v2053
        %v2055 = vpop.f32.mrf.mxu0
        %2056 = vdwg.mxu0
        %v2057 = vmax.f32 %v1906, 0.0
        %v2058 = vmax.f32 %v1908, 0.0
        %v2059 = vmax.f32 %v2019, 0.0
        %v2060 = vmax.f32 %v1912, 0.0
        %v2061 = vmax.f32 %v1914, 0.0
        %v2062 = vmax.f32 %v2024, 0.0
        %v2063 = vmax.f32 %v1918, 0.0
        %v2064 = vmax.f32 %v1920, 0.0
        %v2065 = vmax.f32 %v2029, 0.0
        %v2066 = vmax.f32 %v1924, 0.0
        %v2067 = vmax.f32 %v1926, 0.0
        %v2068 = vmax.f32 %v2034, 0.0
        %v2069 = vmax.f32 %v1930, 0.0
        %v2070 = vmax.f32 %v1932, 0.0
        %v2071 = vmax.f32 %v2039, 0.0
        %v2072 = vmax.f32 %v1936, 0.0
        %v2073 = vmax.f32 %v1938, 0.0
        %v2074 = vmax.f32 %v2044, 0.0
        %v2075 = vmax.f32 %v1942, 0.0
        %v2076 = vmax.f32 %v1944, 0.0
        %v2077 = vmax.f32 %v2049, 0.0
        %v2078 = vmax.f32 %v1948, 0.0
        %v2079 = vmax.f32 %v1950, 0.0
        %v2080 = vmax.f32 %v2054, 0.0
        %v2081 = vld [vmem:[%s3] sm:$0xff]
        %vm2082 = vcmask 523264
        %v2084 = vsel %vm2082, %v2081, 0
        %2086 = vmatprep.subr.mxu0 0.0
        %2087 = vmatpush1.msra.mxu0 0.0
        %2088 = vmatprep.subr.mxu0 0.0
        %2089 = vmatpush1.msra.mxu0 0.0
        %2090 = vmatprep.subr.mxu0 0.0
        %2091 = vmatpush1.msra.mxu0 0.0
        %2092 = vmatprep.subr.mxu0 0.0
        %2093 = vmatpush1.msra.mxu0 0.0
        %2094 = vmatprep.subr.mxu0 0.0
        %2095 = vmatpush1.msra.mxu0 0.0
        %2096 = vmatprep.subr.mxu0 0.0
        %2097 = vmatpush1.msra.mxu0 0.0
        %2098 = vmatprep.subr.mxu0 0.0
        %2099 = vmatpush1.msra.mxu0 0.0
        %2100 = vmatprep.subr.mxu0 0.0
        %2101 = vmatpush1.msra.mxu0 0.0
        %2102 = vmatprep.subr.mxu0 %v2079
        %2103 = vmatpush1.msra.mxu0 %v2078
        %2104 = vmatprep.subr.mxu0 %v2076
        %2105 = vmatpush1.msra.mxu0 %v2075
        %2106 = vmatprep.subr.mxu0 %v2073
        %2107 = vmatpush1.msra.mxu0 %v2072
        %2108 = vmatprep.subr.mxu0 %v2070
        %2109 = vmatpush1.msra.mxu0 %v2069
        %2110 = vmatprep.subr.mxu0 %v2067
        %2111 = vmatpush1.msra.mxu0 %v2066
        %2112 = vmatprep.subr.mxu0 %v2064
        %2113 = vmatpush1.msra.mxu0 %v2063
        %2114 = vmatprep.subr.mxu0 %v2061
        %2115 = vmatpush1.msra.mxu0 %v2060
        %2116 = vmatprep.subr.mxu0 %v2058
        %2117 = vmatpush1.msra.mxu0 %v2057
        %2118 = vmatprep.subr.mxu0 0.0
        %2119 = vmatpush2.msra.mxu0 0.0
        %2120 = vmatprep.subr.mxu0 0.0
        %2121 = vmatpush2.msra.mxu0 0.0
        %2122 = vmatprep.subr.mxu0 0.0
        %2123 = vmatpush2.msra.mxu0 0.0
        %2124 = vmatprep.subr.mxu0 0.0
        %2125 = vmatpush2.msra.mxu0 0.0
        %2126 = vmatprep.subr.mxu0 0.0
        %2127 = vmatpush2.msra.mxu0 0.0
        %2128 = vmatprep.subr.mxu0 0.0
        %2129 = vmatpush2.msra.mxu0 0.0
        %2130 = vmatprep.subr.mxu0 0.0
        %2131 = vmatpush2.msra.mxu0 0.0
        %2132 = vmatprep.subr.mxu0 0.0
        %2133 = vmatpush2.msra.mxu0 0.0
        %2134 = vmatprep.subr.mxu0 0.0
        %2135 = vmatpush2.msra.mxu0 0.0
        %2136 = vmatprep.subr.mxu0 0.0
        %2137 = vmatpush2.msra.mxu0 0.0
        %2138 = vmatprep.subr.mxu0 0.0
        %2139 = vmatpush2.msra.mxu0 0.0
        %2140 = vmatprep.subr.mxu0 0.0
        %2141 = vmatpush2.msra.mxu0 0.0
        %2142 = vmatprep.subr.mxu0 0.0
        %2143 = vmatpush2.msra.mxu0 0.0
        %2144 = vmatprep.subr.mxu0 0.0
        %2145 = vmatpush2.msra.mxu0 0.0
        %2146 = vmatprep.subr.mxu0 0.0
        %2147 = vmatpush2.msra.mxu0 0.0
        %2148 = vmatprep.subr.mxu0 0.0
        %2149 = vmatpush2.msra.mxu0 0.0
        %2150 = vmatprep.mubr.f32.mxu0 0.0
        %2151 = vmatmul.mubr.f32.gmra.mxu0 %v2084
        %v2152 = vpop.f32.mrf.mxu0
        %v2153 = vadd.f32 0.0, %v2152
        %v2154 = vpop.f32.mrf.mxu0
        %v2155 = vadd.f32 0.0, %v2154
        %2156 = vdwg.mxu0
        %2157 = vmatprep.subr.mxu0 0.0
        %2158 = vmatpush1.msra.mxu0 0.0
        %2159 = vmatprep.subr.mxu0 0.0
        %2160 = vmatpush1.msra.mxu0 0.0
        %2161 = vmatprep.subr.mxu0 0.0
        %2162 = vmatpush1.msra.mxu0 0.0
        %2163 = vmatprep.subr.mxu0 0.0
        %2164 = vmatpush1.msra.mxu0 0.0
        %2165 = vmatprep.subr.mxu0 0.0
        %2166 = vmatpush1.msra.mxu0 0.0
        %2167 = vmatprep.subr.mxu0 0.0
        %2168 = vmatpush1.msra.mxu0 0.0
        %2169 = vmatprep.subr.mxu0 0.0
        %2170 = vmatpush1.msra.mxu0 0.0
        %2171 = vmatprep.subr.mxu0 0.0
        %2172 = vmatpush1.msra.mxu0 0.0
        %2173 = vmatprep.subr.mxu0 0.0
        %2174 = vmatpush1.msra.mxu0 %v2080
        %2175 = vmatprep.subr.mxu0 0.0
        %2176 = vmatpush1.msra.mxu0 %v2077
        %2177 = vmatprep.subr.mxu0 0.0
        %2178 = vmatpush1.msra.mxu0 %v2074
        %2179 = vmatprep.subr.mxu0 0.0
        %2180 = vmatpush1.msra.mxu0 %v2071
        %2181 = vmatprep.subr.mxu0 0.0
        %2182 = vmatpush1.msra.mxu0 %v2068
        %2183 = vmatprep.subr.mxu0 0.0
        %2184 = vmatpush1.msra.mxu0 %v2065
        %2185 = vmatprep.subr.mxu0 0.0
        %2186 = vmatpush1.msra.mxu0 %v2062
        %2187 = vmatprep.subr.mxu0 0.0
        %2188 = vmatpush1.msra.mxu0 %v2059
        %2189 = vmatprep.subr.mxu0 0.0
        %2190 = vmatpush2.msra.mxu0 0.0
        %2191 = vmatprep.subr.mxu0 0.0
        %2192 = vmatpush2.msra.mxu0 0.0
        %2193 = vmatprep.subr.mxu0 0.0
        %2194 = vmatpush2.msra.mxu0 0.0
        %2195 = vmatprep.subr.mxu0 0.0
        %2196 = vmatpush2.msra.mxu0 0.0
        %2197 = vmatprep.subr.mxu0 0.0
        %2198 = vmatpush2.msra.mxu0 0.0
        %2199 = vmatprep.subr.mxu0 0.0
        %2200 = vmatpush2.msra.mxu0 0.0
        %2201 = vmatprep.subr.mxu0 0.0
        %2202 = vmatpush2.msra.mxu0 0.0
        %2203 = vmatprep.subr.mxu0 0.0
        %2204 = vmatpush2.msra.mxu0 0.0
        %2205 = vmatprep.subr.mxu0 0.0
        %2206 = vmatpush2.msra.mxu0 0.0
        %2207 = vmatprep.subr.mxu0 0.0
        %2208 = vmatpush2.msra.mxu0 0.0
        %2209 = vmatprep.subr.mxu0 0.0
        %2210 = vmatpush2.msra.mxu0 0.0
        %2211 = vmatprep.subr.mxu0 0.0
        %2212 = vmatpush2.msra.mxu0 0.0
        %2213 = vmatprep.subr.mxu0 0.0
        %2214 = vmatpush2.msra.mxu0 0.0
        %2215 = vmatprep.subr.mxu0 0.0
        %2216 = vmatpush2.msra.mxu0 0.0
        %2217 = vmatprep.subr.mxu0 0.0
        %2218 = vmatpush2.msra.mxu0 0.0
        %2219 = vmatprep.subr.mxu0 0.0
        %2220 = vmatpush2.msra.mxu0 0.0
        %2221 = vmatprep.mubr.f32.mxu0 0.0
        %2222 = vmatmul.mubr.f32.gmra.mxu0 %v2084
        %v2223 = vpop.f32.mrf.mxu0
        %v2224 = vadd.f32 0.0, %v2223
        %v2225 = vpop.f32.mrf.mxu0
        %2226 = vdwg.mxu0
        %v2227 = vld [vmem:[#allocation3] sm:$0x1]
        %2229 = vset.pattern.permute.xlu0 0
        %2230 = vperm.xlu0 %2229, %v2227
        %v2231 = vpop.permute.xlu0 %2230
        %v2233 = vlaneseq
        %v2234 = vshrl.u32 %v2233, 7
        %v2235 = vsub.s32 0, %v2234
        %v2236 = vrot.slane %v2231, %v2235
        %v2237 = vadd.f32 %v2153, %v2236
        %v2238 = vadd.f32 %v2155, %v2236
        %v2239 = vadd.f32 %v2224, %v2236
        %v2243 = vcombine.low %v2237, %v2238
        %v2245 = vunpack.c.l.s4 1966171168
        %v2246 = vunpack.c.0.s8 %v2245
        %v2247 = vlaneseq
        %v2248 = vshrl.u32 %v2247, 7
        %v2249 = vsub.s32 %v2246, %v2248
        %v2250 = vrot.slane %v2243, %v2249
        %v2252 = vunpack.c.l.s4 1966171168
        %v2253 = vunpack.c.0.s8 %v2252
        %v2254 = vlaneseq
        %v2255 = vshrl.u32 %v2254, 7
        %v2256 = vsub.s32 %v2253, %v2255
        %v2257 = vrot.slane %v2239, %v2256
        %v2258 = vcombine.low %v2250, %v2257
        %v2260 = vunpack.c.l.s4 1966171168
        %v2261 = vunpack.c.0.s8 %v2260
        %v2262 = vlaneseq
        %v2263 = vshrl.u32 %v2262, 7
        %v2264 = vsub.s32 %v2261, %v2263
        %v2265 = vrot.slane %v2258, %v2264
        %2267 = vst.msk [vmem:[%s315] sm:$0x7] %vm585, %v2265
        %s2268 = smul.u32 3, %s18
        %p2269 = scmp.lt.s32.totalorder %s2268, 5
        %s2270 = scalar_select %p2269, %s2268, 5
        %s2271 = scalar_lea.vmem %s5, %s2270
        // Predicated region
        $region64: #{subnet_fc_forward.1} parent=58 // pred_check
          %p2272 = pneg %p146
        $region65: #{subnet_fc_forward.1} parent=58 // pred_check_branch
          %2274 = sbr.rel (%p2272) target = $region67
        $region66: #{subnet_fc_forward.1} parent=58 // pred_region
          %s2275 = smul.u32 3, %s18
        $region67: #{subnet_fc_forward.1} parent=58 // pred_fallthru
          _
      $region59: #{subnet_fc_forward.1} parent=5 // pred_fallthru
        _
      %p2276 = scmp.le.s32.totalorder 2, %s13
      // Predicated region
      $region68: #{subnet_fc_forward.1} parent=5 // pred_check
        %p2277 = pneg %p2276
      $region69: #{subnet_fc_forward.1} parent=5 // pred_check_branch
        %2279 = sbr.rel (%p2277) target = $region71
      $region70: #{subnet_fc_forward.1} parent=5 // pred_region
        %s2280 = ssub.s32 %s13, 2
        // Predicated region
        $region72: #{subnet_fc_forward.1} parent=70 // pred_check
          %p2281 = pneg %p152
        $region73: #{subnet_fc_forward.1} parent=70 // pred_check_branch
          %2283 = sbr.rel (%p2281) target = $region75
        $region74: #{subnet_fc_forward.1} parent=70 // pred_region
          %s2284 = smul.u32 3, %s19
          %p2285 = scmp.lt.s32.totalorder %s2284, 5
          %s2286 = scalar_select %p2285, %s2284, 5
          %s2287 = scalar_lea.vmem %s5, %s2286
        $region75: #{subnet_fc_forward.1} parent=70 // pred_fallthru
          _
      $region71: #{subnet_fc_forward.1} parent=5 // pred_fallthru
        _
    $region6: #{subnet_fc_forward.1} parent=1 // loop_footer
      %s17 = sadd.s32 1, %s13
    $region7: #{subnet_fc_forward.1} parent=1 // loop_footer_branch
      %12 = sbr.rel target = $region3
    $region8: #{subnet_fc_forward.1} parent=1 // loop_exit
      _

</llo_original>
